<compile_context>
chip_gen: v7x
topology: tpu7x:2x2x1
jax: 0.10.0
libtpu: 0.0.40
codegen_flags: <defaults>
</compile_context>

<pallas_src>
import functools

import jax
import jax.numpy as jnp
from jax import lax
from jax.experimental import pallas as pl
from jax.experimental.pallas import tpu as pltpu


def _upsample_block_kernel(xpad_ref, w_ref, b_ref, a_ref, out_ref):
    """One batch element per grid step.

    xpad_ref: (1, H+2, W+2, Cin)  zero-padded input tile (NHWC, f32)
    w_ref:    (9*Cin, Cout)       conv weights in im2col layout (bf16)
    b_ref:    (1, Cout)           conv bias (f32)
    a_ref:    (1, 1)              PReLU slope (f32)
    out_ref:  (1, H*W, Cout)      conv + bias + PReLU output (f32)
    """
    _, HP, WP, Cin = xpad_ref.shape
    H, W = HP - 2, WP - 2
    Cout = out_ref.shape[-1]
    rows = H * W

    xpad = xpad_ref[...]  # (1, HP, WP, Cin)

    # im2col: nine shifted (rows, Cin) views concatenated along the
    # contraction axis -> a single (rows, 9*Cin) x (9*Cin, Cout) MXU matmul.
    patches = jnp.concatenate(
        [xpad[:, dy:dy + H, dx:dx + W, :].reshape(rows, Cin)
         for dy in range(3) for dx in range(3)],
        axis=-1)                                          # (rows, 9*Cin) f32

    acc = jnp.dot(patches.astype(jnp.bfloat16), w_ref[...],
                  preferred_element_type=jnp.float32)     # (rows, Cout) f32
    acc = acc + b_ref[...]

    # PReLU with a single shared slope (PyTorch nn.PReLU() default).
    a = a_ref[0, 0]
    y = jnp.where(acc > 0, acc, a * acc)

    out_ref[...] = y.reshape(1, rows, Cout).astype(out_ref.dtype)


@functools.partial(jax.jit, static_argnames=("scale_factor",))
def upsample_block(x_nchw, params, scale_factor=2):
    """x_nchw: (N, C, H, W) f32.  Returns (N, C, H*r, W*r) f32."""
    N, C, H, W = x_nchw.shape
    r = scale_factor
    Cout = C * r * r

    # NCHW -> NHWC and zero-pad spatial dims by 1 for the 3x3 / pad=1 conv.
    x_nhwc = jnp.transpose(x_nchw, (0, 2, 3, 1))
    x_pad = jnp.pad(x_nhwc, ((0, 0), (1, 1), (1, 1), (0, 0)))

    # OIHW -> (dy, dx, Cin, Cout) -> (9*Cin, Cout); cast once to bf16 for MXU.
    w_mat = jnp.transpose(params["w"], (2, 3, 1, 0)).reshape(9 * C, Cout)
    w_mat = w_mat.astype(jnp.bfloat16)
    b = params["b"].reshape(1, Cout).astype(jnp.float32)
    a = params["prelu_a"].reshape(1, 1).astype(jnp.float32)

    conv_out = pl.pallas_call(
        _upsample_block_kernel,
        out_shape=jax.ShapeDtypeStruct((N, H * W, Cout), jnp.float32),
        grid_spec=pltpu.PrefetchScalarGridSpec(
            num_scalar_prefetch=0,
            grid=(N,),
            in_specs=[
                pl.BlockSpec((1, H + 2, W + 2, C), lambda n: (n, 0, 0, 0)),
                pl.BlockSpec((9 * C, Cout), lambda n: (0, 0)),
                pl.BlockSpec((1, Cout), lambda n: (0, 0)),
                pl.BlockSpec((1, 1), lambda n: (0, 0)),
            ],
            out_specs=pl.BlockSpec((1, H * W, Cout), lambda n: (n, 0, 0)),
        ),
        compiler_params=pltpu.CompilerParams(
            dimension_semantics=("parallel",),
            vmem_limit_bytes=32 * 1024 * 1024,
        ),
    )(x_pad, w_mat, b, a)

    # PixelShuffle(r): out[n, c, h*r+i, w*r+j] = conv[n, c*r*r + i*r + j, h, w]
    # (pure index permutation; done as an XLA reshape/transpose).
    y = conv_out.reshape(N, H, W, C, r, r)
    y = jnp.transpose(y, (0, 3, 1, 4, 2, 5)).reshape(N, C, H * r, W * r)
    return y


def upsample_block_reference(x_nchw, params, scale_factor=2):
    """Pure-JAX reference of the PyTorch module.  Operands are bf16-rounded to
    mirror the kernel's bf16 MXU inputs with f32 accumulation."""
    xq = x_nchw.astype(jnp.bfloat16).astype(jnp.float32)
    wq = params["w"].astype(jnp.bfloat16).astype(jnp.float32)
    y = lax.conv_general_dilated(
        xq, wq, window_strides=(1, 1), padding=((1, 1), (1, 1)),
        dimension_numbers=("NCHW", "OIHW", "NCHW"),
        precision=lax.Precision.HIGHEST)
    y = y + params["b"].reshape(1, -1, 1, 1)

    N, K, H, W = y.shape
    r = scale_factor
    C = K // (r * r)
    y = y.reshape(N, C, r, r, H, W)
    y = jnp.transpose(y, (0, 1, 4, 2, 5, 3)).reshape(N, C, H * r, W * r)

    a = params["prelu_a"][0]
    return jnp.where(y > 0, y, a * y)


if __name__ == "__main__":
    N, C, H, W = 2, 4, 16, 16
    r = 2
    Cout = C * r * r

    key = jax.random.PRNGKey(0)
    ks = jax.random.split(key, 3)
    params = {
        "w": 0.1 * jax.random.normal(ks[0], (Cout, C, 3, 3), jnp.float32),
        "b": 0.1 * jax.random.normal(ks[1], (Cout,), jnp.float32),
        "prelu_a": jnp.full((1,), 0.25, jnp.float32),  # PyTorch PReLU default
    }
    x = jax.random.normal(ks[2], (N, C, H, W), jnp.float32)

    out = upsample_block(x, params, scale_factor=r)
    out = jax.block_until_ready(out)

    ref = upsample_block_reference(x, params, scale_factor=r)
    assert out.shape == (N, C, H * r, W * r), out.shape
    max_err = float(jnp.max(jnp.abs(out - ref)))
    assert jnp.allclose(out, ref, atol=1e-3, rtol=1e-3), max_err

    print("KERNEL_OK")
</pallas_src>

<mosaic_0001>
module attributes {stable_mosaic.version = 11 : i64} {
  func.func @_upsample_block_kernel(%arg0: i32, %arg1: memref<1x18x18x4xf32, #tpu.memory_space<vmem>>, %arg2: memref<36x16xbf16, #tpu.memory_space<vmem>>, %arg3: memref<1x16xf32, #tpu.memory_space<vmem>>, %arg4: memref<1x1xf32, #tpu.memory_space<vmem>>, %arg5: memref<1x256x16xf32, #tpu.memory_space<vmem>>) attributes {dimension_semantics = [#tpu.dimension_semantics<parallel>], iteration_bounds = array<i64: 2>, scalar_prefetch = 0 : i64, scratch_operands = 0 : i64, tpu.core_type = #tpu.core_type<tc>, window_params = [{transform_indices = @transform_0, window_bounds = array<i64: 1, 18, 18, 4>}, {pipeline_mode = #tpu.pipeline_mode<synchronous>, transform_indices = @transform_1, window_bounds = array<i64: 36, 16>}, {pipeline_mode = #tpu.pipeline_mode<synchronous>, transform_indices = @transform_2, window_bounds = array<i64: 1, 16>}, {pipeline_mode = #tpu.pipeline_mode<synchronous>, transform_indices = @transform_3, window_bounds = array<i64: 1, 1>}, {transform_indices = @transform_4, window_bounds = array<i64: 1, 256, 16>}]} {
    %c0 = arith.constant 0 : index
    %c0_0 = arith.constant 0 : index
    %c0_1 = arith.constant 0 : index
    %c0_2 = arith.constant 0 : index
    %0 = vector.load %arg1[%c0, %c0_0, %c0_1, %c0_2] : memref<1x18x18x4xf32, #tpu.memory_space<vmem>>, vector<1x18x18x4xf32>
    %1 = vector.extract_strided_slice %0 {offsets = [0, 0, 0, 0], sizes = [1, 16, 16, 4], strides = [1, 1, 1, 1]} : vector<1x18x18x4xf32> to vector<1x16x16x4xf32>
    %2 = vector.shape_cast %1 : vector<1x16x16x4xf32> to vector<256x4xf32>
    %3 = vector.extract_strided_slice %0 {offsets = [0, 0, 1, 0], sizes = [1, 16, 16, 4], strides = [1, 1, 1, 1]} : vector<1x18x18x4xf32> to vector<1x16x16x4xf32>
    %4 = vector.shape_cast %3 : vector<1x16x16x4xf32> to vector<256x4xf32>
    %5 = vector.extract_strided_slice %0 {offsets = [0, 0, 2, 0], sizes = [1, 16, 16, 4], strides = [1, 1, 1, 1]} : vector<1x18x18x4xf32> to vector<1x16x16x4xf32>
    %6 = vector.shape_cast %5 : vector<1x16x16x4xf32> to vector<256x4xf32>
    %7 = vector.extract_strided_slice %0 {offsets = [0, 1, 0, 0], sizes = [1, 16, 16, 4], strides = [1, 1, 1, 1]} : vector<1x18x18x4xf32> to vector<1x16x16x4xf32>
    %8 = vector.shape_cast %7 : vector<1x16x16x4xf32> to vector<256x4xf32>
    %9 = vector.extract_strided_slice %0 {offsets = [0, 1, 1, 0], sizes = [1, 16, 16, 4], strides = [1, 1, 1, 1]} : vector<1x18x18x4xf32> to vector<1x16x16x4xf32>
    %10 = vector.shape_cast %9 : vector<1x16x16x4xf32> to vector<256x4xf32>
    %11 = vector.extract_strided_slice %0 {offsets = [0, 1, 2, 0], sizes = [1, 16, 16, 4], strides = [1, 1, 1, 1]} : vector<1x18x18x4xf32> to vector<1x16x16x4xf32>
    %12 = vector.shape_cast %11 : vector<1x16x16x4xf32> to vector<256x4xf32>
    %13 = vector.extract_strided_slice %0 {offsets = [0, 2, 0, 0], sizes = [1, 16, 16, 4], strides = [1, 1, 1, 1]} : vector<1x18x18x4xf32> to vector<1x16x16x4xf32>
    %14 = vector.shape_cast %13 : vector<1x16x16x4xf32> to vector<256x4xf32>
    %15 = vector.extract_strided_slice %0 {offsets = [0, 2, 1, 0], sizes = [1, 16, 16, 4], strides = [1, 1, 1, 1]} : vector<1x18x18x4xf32> to vector<1x16x16x4xf32>
    %16 = vector.shape_cast %15 : vector<1x16x16x4xf32> to vector<256x4xf32>
    %17 = vector.extract_strided_slice %0 {offsets = [0, 2, 2, 0], sizes = [1, 16, 16, 4], strides = [1, 1, 1, 1]} : vector<1x18x18x4xf32> to vector<1x16x16x4xf32>
    %18 = vector.shape_cast %17 : vector<1x16x16x4xf32> to vector<256x4xf32>
    %19 = tpu.concatenate %2, %4, %6, %8, %10, %12, %14, %16, %18 in 1 : vector<256x4xf32>, vector<256x4xf32>, vector<256x4xf32>, vector<256x4xf32>, vector<256x4xf32>, vector<256x4xf32>, vector<256x4xf32>, vector<256x4xf32>, vector<256x4xf32> -> vector<256x36xf32>
    %20 = arith.truncf %19 : vector<256x36xf32> to vector<256x36xbf16>
    %c0_3 = arith.constant 0 : index
    %c0_4 = arith.constant 0 : index
    %21 = vector.load %arg2[%c0_3, %c0_4] : memref<36x16xbf16, #tpu.memory_space<vmem>>, vector<36x16xbf16>
    %cst = arith.constant dense<0.000000e+00> : vector<256x16xf32>
    %22 = tpu.matmul %20, %21, %cst {dimension_numbers = #tpu.dot_dimension_numbers<[1], [0], [0], [1], [0, 0, 1, 1], [], []>} : vector<256x36xbf16>, vector<36x16xbf16>, vector<256x16xf32> -> vector<256x16xf32>
    %c0_5 = arith.constant 0 : index
    %c0_6 = arith.constant 0 : index
    %23 = vector.load %arg3[%c0_5, %c0_6] : memref<1x16xf32, #tpu.memory_space<vmem>>, vector<1x16xf32>
    %24 = vector.broadcast %23 : vector<1x16xf32> to vector<256x16xf32>
    %25 = arith.addf %22, %24 : vector<256x16xf32>
    %c0_7 = arith.constant 0 : index
    %c0_8 = arith.constant 0 : index
    %26 = vector.load %arg4[%c0_7, %c0_8] : memref<1x1xf32, #tpu.memory_space<vmem>>, vector<1x1xf32>
    %27 = vector.extract %26[0, 0] : f32 from vector<1x1xf32>
    %cst_9 = arith.constant 0.000000e+00 : f32
    %28 = vector.broadcast %cst_9 : f32 to vector<256x16xf32>
    %29 = arith.cmpf ogt, %25, %28 : vector<256x16xf32>
    %30 = vector.broadcast %27 : f32 to vector<256x16xf32>
    %31 = arith.mulf %30, %25 : vector<256x16xf32>
    %32 = arith.select %29, %25, %31 : vector<256x16xi1>, vector<256x16xf32>
    %33 = vector.shape_cast %32 : vector<256x16xf32> to vector<1x256x16xf32>
    %c0_10 = arith.constant 0 : index
    %c0_11 = arith.constant 0 : index
    %c0_12 = arith.constant 0 : index
    %34 = vector.load %arg5[%c0_10, %c0_11, %c0_12] : memref<1x256x16xf32, #tpu.memory_space<vmem>>, vector<1x256x16xf32>
    tpu.vector_store %arg5[%c0_10, %c0_11, %c0_12], %33 {strides = array<i32>} : memref<1x256x16xf32, #tpu.memory_space<vmem>>, vector<1x256x16xf32>,
    return
  }
  func.func @transform_0(%arg0: i32) -> (i32, i32, i32, i32) {
    %c0_i32 = arith.constant 0 : i32
    %c0_i32_0 = arith.constant 0 : i32
    %c0_i32_1 = arith.constant 0 : i32
    %c0_i32_2 = arith.constant 0 : i32
    return %arg0, %c0_i32, %c0_i32_0, %c0_i32_1 : i32, i32, i32, i32
  }
  func.func @transform_1(%arg0: i32) -> (i32, i32) {
    %c0_i32 = arith.constant 0 : i32
    %c0_i32_0 = arith.constant 0 : i32
    %c0_i32_1 = arith.constant 0 : i32
    return %c0_i32, %c0_i32_0 : i32, i32
  }
  func.func @transform_2(%arg0: i32) -> (i32, i32) {
    %c0_i32 = arith.constant 0 : i32
    %c0_i32_0 = arith.constant 0 : i32
    %c0_i32_1 = arith.constant 0 : i32
    return %c0_i32, %c0_i32_0 : i32, i32
  }
  func.func @transform_3(%arg0: i32) -> (i32, i32) {
    %c0_i32 = arith.constant 0 : i32
    %c0_i32_0 = arith.constant 0 : i32
    %c0_i32_1 = arith.constant 0 : i32
    return %c0_i32, %c0_i32_0 : i32, i32
  }
  func.func @transform_4(%arg0: i32) -> (i32, i32, i32) {
    %c0_i32 = arith.constant 0 : i32
    %c0_i32_0 = arith.constant 0 : i32
    %c0_i32_1 = arith.constant 0 : i32
    return %arg0, %c0_i32, %c0_i32_0 : i32, i32, i32
  }
}

</mosaic_0001>

<llo_original>
// kernel: upsample_block.1
$region0: #{upsample_block.1}
  #allocation0 [shape = 'u32[]', space=smem, size = 0x4, offset = 0x4, fixed_abs, tag = 'smem constant byte address 0x4 - core index']
  #allocation1 [shape = 'u32[144,128]{1,0:T(1,128)}', space=vmem, size = 0x12000, scoped, tag = 'internal scratch']
  #allocation2 [shape = 'f32[1,1]{1,0:T(1,128)S(1)}', space=vmem, size = 0x200, scoped, tag = 'scoped memory for upsample_block.1']
  %s0 = inlined_call_operand.vmem [shape: f32[2,18,18,4], index: 0, kind: input, shape index: {}]
  %s1 = inlined_call_operand.vmem [shape: bf16[36,16], index: 1, kind: input, shape index: {}]
  %s2 = inlined_call_operand.vmem [shape: f32[1,16], index: 2, kind: input, shape index: {}]
  %s3 = inlined_call_operand.<no memory space> [shape: f32[1,1], index: 3, kind: input, shape index: {}]
  %s4 = inlined_call_operand.vmem [shape: f32[2,256,16], index: 4, kind: output, shape index: {}]
  %s5 = sld [smem:[#allocation0]]
  $region49: #{upsample_block.1} parent=0
    _
  %s7 = ssub.s32 1, %s5
  %s8 = scalar_select 0, %s7, %s5
  %v9 = vstv %s3
  %10 = vst [vmem:[#allocation2] sm:$0x1] %v9
  loop: start=0, step=1, limit=4
  $region2: #{upsample_block.1} parent=0 // loop_pre_header
    _
  $region3: #{upsample_block.1} parent=0 // loop_header
    %s12 = sphi 0, %s16
    %p13 = scmp.ge.s32.totalorder %s12, 4
    %s22 = sphi 0, %s24
    %s25 = sphi 0, %s22
    %s26 = sphi 0, %s25
    %s42 = sphi 0, %s26
    %s46 = sphi 0, %s46
    %s48 = sphi 0, %s46
    %s49 = sphi 0, %s48
    %s63 = sphi 0, %s49
    %s67 = sphi 0, %s67
    %s69 = sphi 0, %s67
    %s70 = sphi 0, %s69
    %s84 = sphi 0, %s70
    %s88 = sphi 0, %s88
    %s90 = sphi 0, %s88
    %s91 = sphi 0, %s90
    %s105 = sphi 0, %s91
    %s111 = sphi 0, %s113
    %s114 = sphi 0, %s111
    %s115 = sphi 0, %s114
    %s131 = sphi 0, %s115
  $region4: #{upsample_block.1} parent=0 // loop_header_branch
    %15 = sbr.rel (%p13) target = $region8
  $region5: #{upsample_block.1} parent=0 // loop_body
    %s17 = ssub.s32 %s12, 1
    %s18 = ssub.s32 %s12, 2
    %s19 = sadd.s32 %s12, 1
    %s20 = ssub.s32 %s12, %s19
    %p21 = scmp.eq.s32.totalorder %s20, 0
    %s23 = sadd.s32 %s22, 1
    %s24 = scalar_select %p21, %s22, %s23
    %p27 = pneg %p21
    %p28 = scmp.eq.s32.totalorder %s12, 1
    %p29 = por %p27, %p28
    %p30 = scmp.ne.s32.totalorder %s22, %s25
    %p31 = scmp.eq.s32.totalorder %s12, 0
    %p32 = por %p30, %p31
    %p33 = scmp.ne.s32.totalorder %s22, %s25
    %p34 = scmp.eq.s32.totalorder %s17, 1
    %p35 = por %p33, %p34
    %p36 = scmp.ne.s32.totalorder %s25, %s26
    %p37 = scmp.eq.s32.totalorder %s17, 0
    %p38 = por %p36, %p37
    %p39 = scmp.ne.s32.totalorder %s25, %s26
    %p40 = scmp.eq.s32.totalorder %s18, 1
    %p41 = por %p39, %p40
    %p43 = scmp.ne.s32.totalorder %s26, %s42
    %p44 = scmp.eq.s32.totalorder %s18, 0
    %p45 = por %p43, %p44
    %s47 = sadd.s32 %s46, 1
    %p50 = scmp.eq.s32.totalorder %s12, 1
    %p51 = scmp.ne.s32.totalorder %s46, %s48
    %p52 = scmp.eq.s32.totalorder %s12, 0
    %p53 = por %p51, %p52
    %p54 = scmp.ne.s32.totalorder %s46, %s48
    %p55 = scmp.eq.s32.totalorder %s17, 1
    %p56 = por %p54, %p55
    %p57 = scmp.ne.s32.totalorder %s48, %s49
    %p58 = scmp.eq.s32.totalorder %s17, 0
    %p59 = por %p57, %p58
    %p60 = scmp.ne.s32.totalorder %s48, %s49
    %p61 = scmp.eq.s32.totalorder %s18, 1
    %p62 = por %p60, %p61
    %p64 = scmp.ne.s32.totalorder %s49, %s63
    %p65 = scmp.eq.s32.totalorder %s18, 0
    %p66 = por %p64, %p65
    %s68 = sadd.s32 %s67, 1
    %p71 = scmp.eq.s32.totalorder %s12, 1
    %p72 = scmp.ne.s32.totalorder %s67, %s69
    %p73 = scmp.eq.s32.totalorder %s12, 0
    %p74 = por %p72, %p73
    %p75 = scmp.ne.s32.totalorder %s67, %s69
    %p76 = scmp.eq.s32.totalorder %s17, 1
    %p77 = por %p75, %p76
    %p78 = scmp.ne.s32.totalorder %s69, %s70
    %p79 = scmp.eq.s32.totalorder %s17, 0
    %p80 = por %p78, %p79
    %p81 = scmp.ne.s32.totalorder %s69, %s70
    %p82 = scmp.eq.s32.totalorder %s18, 1
    %p83 = por %p81, %p82
    %p85 = scmp.ne.s32.totalorder %s70, %s84
    %p86 = scmp.eq.s32.totalorder %s18, 0
    %p87 = por %p85, %p86
    %s89 = sadd.s32 %s88, 1
    %p92 = scmp.eq.s32.totalorder %s12, 1
    %p93 = scmp.ne.s32.totalorder %s88, %s90
    %p94 = scmp.eq.s32.totalorder %s12, 0
    %p95 = por %p93, %p94
    %p96 = scmp.ne.s32.totalorder %s88, %s90
    %p97 = scmp.eq.s32.totalorder %s17, 1
    %p98 = por %p96, %p97
    %p99 = scmp.ne.s32.totalorder %s90, %s91
    %p100 = scmp.eq.s32.totalorder %s17, 0
    %p101 = por %p99, %p100
    %p102 = scmp.ne.s32.totalorder %s90, %s91
    %p103 = scmp.eq.s32.totalorder %s18, 1
    %p104 = por %p102, %p103
    %p106 = scmp.ne.s32.totalorder %s91, %s105
    %p107 = scmp.eq.s32.totalorder %s18, 0
    %p108 = por %p106, %p107
    %s109 = ssub.s32 %s12, %s19
    %p110 = scmp.eq.s32.totalorder %s109, 0
    %s112 = sadd.s32 %s111, 1
    %s113 = scalar_select %p110, %s111, %s112
    %p116 = pneg %p110
    %p117 = scmp.eq.s32.totalorder %s12, 1
    %p118 = por %p116, %p117
    %p119 = scmp.ne.s32.totalorder %s111, %s114
    %p120 = scmp.eq.s32.totalorder %s12, 0
    %p121 = por %p119, %p120
    %p122 = scmp.ne.s32.totalorder %s111, %s114
    %p123 = scmp.eq.s32.totalorder %s17, 1
    %p124 = por %p122, %p123
    %p125 = scmp.ne.s32.totalorder %s114, %s115
    %p126 = scmp.eq.s32.totalorder %s17, 0
    %p127 = por %p125, %p126
    %p128 = scmp.ne.s32.totalorder %s114, %s115
    %p129 = scmp.eq.s32.totalorder %s18, 1
    %p130 = por %p128, %p129
    %p132 = scmp.ne.s32.totalorder %s115, %s131
    %p133 = scmp.eq.s32.totalorder %s18, 0
    %p134 = por %p132, %p133
    %p135 = scmp.le.s32.totalorder 1, %s12
    %p136 = scmp.lt.s32.totalorder %s12, 3
    %p137 = pnand %p135, %p136
    %p138 = pneg %p137
    // Predicated region
    $region9: #{upsample_block.1} parent=5 // pred_check
      _
    $region10: #{upsample_block.1} parent=5 // pred_check_branch
      %140 = sbr.rel (%p137) target = $region12
    $region11: #{upsample_block.1} parent=5 // pred_region
      %s141 = ssub.s32 %s12, 1
      // Predicated region
      $region13: #{upsample_block.1} parent=11 // pred_check
        %p142 = pneg %p59
      $region14: #{upsample_block.1} parent=11 // pred_check_branch
        %144 = sbr.rel (%p142) target = $region16
      $region15: #{upsample_block.1} parent=11 // pred_region
        _
      $region16: #{upsample_block.1} parent=11 // pred_fallthru
        _
      // Predicated region
      $region17: #{upsample_block.1} parent=11 // pred_check
        %p145 = pneg %p80
      $region18: #{upsample_block.1} parent=11 // pred_check_branch
        %147 = sbr.rel (%p145) target = $region20
      $region19: #{upsample_block.1} parent=11 // pred_region
        _
      $region20: #{upsample_block.1} parent=11 // pred_fallthru
        _
      // Predicated region
      $region21: #{upsample_block.1} parent=11 // pred_check
        %p148 = pneg %p101
      $region22: #{upsample_block.1} parent=11 // pred_check_branch
        %150 = sbr.rel (%p148) target = $region24
      $region23: #{upsample_block.1} parent=11 // pred_region
        _
      $region24: #{upsample_block.1} parent=11 // pred_fallthru
        _
    $region12: #{upsample_block.1} parent=5 // pred_fallthru
      _
    %p151 = scmp.lt.s32.totalorder %s12, 2
    // Predicated region
    $region25: #{upsample_block.1} parent=5 // pred_check
      %p152 = pneg %p151
    $region26: #{upsample_block.1} parent=5 // pred_check_branch
      %154 = sbr.rel (%p152) target = $region28
    $region27: #{upsample_block.1} parent=5 // pred_region
      // Predicated region
      $region29: #{upsample_block.1} parent=27 // pred_check
        %p155 = pneg %p32
      $region30: #{upsample_block.1} parent=27 // pred_check_branch
        %157 = sbr.rel (%p155) target = $region32
      $region31: #{upsample_block.1} parent=27 // pred_region
        %p158 = scmp.lt.s32.totalorder %s12, 1
        %s159 = scalar_select %p158, %s12, 1
        %s160 = smul.addr %s159, 54
        %s161 = smul.addr %s160, 8
        %s162 = scalar_lea.vmem %s0, %s161
      $region32: #{upsample_block.1} parent=27 // pred_fallthru
        _
    $region28: #{upsample_block.1} parent=5 // pred_fallthru
      _
    %p163 = scmp.le.s32.totalorder 1, %s12
    %p164 = scmp.lt.s32.totalorder %s12, 3
    %p165 = pnand %p163, %p164
    %p166 = pneg %p165
    // Predicated region
    $region33: #{upsample_block.1} parent=5 // pred_check
      _
    $region34: #{upsample_block.1} parent=5 // pred_check_branch
      %168 = sbr.rel (%p165) target = $region36
    $region35: #{upsample_block.1} parent=5 // pred_region
      %s169 = ssub.s32 %s12, 1
      %p170 = scmp.lt.s32.totalorder %s17, 1
      %s171 = scalar_select %p170, %s17, 1
      %s172 = smul.addr %s171, 54
      %s173 = smul.addr %s172, 8
      %s174 = scalar_lea.vmem %s0, %s173
      %p175 = pneg %p38
      %p176 = pneg %p35
      %p177 = pneg %p59
      %p178 = pneg %p56
      %p179 = pneg %p80
      %p180 = pneg %p77
      %p181 = pneg %p101
      %p182 = pneg %p98
      %p183 = pneg %p127
      %p184 = pneg %p124
      %p185 = scmp.lt.s32.totalorder %s17, 1
      %s186 = scalar_select %p185, %s17, 1
      %s187 = smul.addr %s186, 32
      %s188 = smul.addr %s187, 8
      %s189 = scalar_lea.vmem %s4, %s188
      %p190 = scmp.lt.s32.totalorder %s17, 1
      %s191 = scalar_select %p190, %s17, 1
      %s192 = smul.addr %s191, 54
      %s193 = smul.addr %s192, 8
      %s194 = scalar_lea.vmem %s0, %s193
      %p195 = scmp.lt.s32.totalorder %s17, 1
      %s196 = scalar_select %p195, %s17, 1
      %s197 = smul.addr %s196, 32
      %s198 = smul.addr %s197, 8
      %s199 = scalar_lea.vmem %s4, %s198
      %v201 = vld [vmem:[%s194] sm:$0xff]
      %v202 = vld [vmem:[%s194 + $0x8] sm:$0xff]
      %v203 = vld [vmem:[%s194 + $0x10] sm:$0x3]
      %v204 = vld [vmem:[%s194 + $0x18] sm:$0xff]
      %v205 = vld [vmem:[%s194 + $0x20] sm:$0xff]
      %v206 = vld [vmem:[%s194 + $0x28] sm:$0x3]
      %v207 = vld [vmem:[%s194 + $0x30] sm:$0xff]
      %v208 = vld [vmem:[%s194 + $0x38] sm:$0xff]
      %v209 = vld [vmem:[%s194 + $0x40] sm:$0x3]
      %v210 = vld [vmem:[%s194 + $0x48] sm:$0xff]
      %v211 = vld [vmem:[%s194 + $0x50] sm:$0xff]
      %v212 = vld [vmem:[%s194 + $0x58] sm:$0x3]
      %v213 = vld [vmem:[%s194 + $0x60] sm:$0xff]
      %v214 = vld [vmem:[%s194 + $0x68] sm:$0xff]
      %v215 = vld [vmem:[%s194 + $0x70] sm:$0x3]
      %v216 = vld [vmem:[%s194 + $0x78] sm:$0xff]
      %v217 = vld [vmem:[%s194 + $0x80] sm:$0xff]
      %v218 = vld [vmem:[%s194 + $0x88] sm:$0x3]
      %v219 = vld [vmem:[%s194 + $0x90] sm:$0xff]
      %v220 = vld [vmem:[%s194 + $0x98] sm:$0xff]
      %v221 = vld [vmem:[%s194 + $0xa0] sm:$0x3]
      %v222 = vld [vmem:[%s194 + $0xa8] sm:$0xff]
      %v223 = vld [vmem:[%s194 + $0xb0] sm:$0xff]
      %v224 = vld [vmem:[%s194 + $0xb8] sm:$0x3]
      %v225 = vld [vmem:[%s194 + $0xc0] sm:$0xff]
      %v226 = vld [vmem:[%s194 + $0xc8] sm:$0xff]
      %v227 = vld [vmem:[%s194 + $0xd0] sm:$0x3]
      %v228 = vld [vmem:[%s194 + $0xd8] sm:$0xff]
      %v229 = vld [vmem:[%s194 + $0xe0] sm:$0xff]
      %v230 = vld [vmem:[%s194 + $0xe8] sm:$0x3]
      %v231 = vld [vmem:[%s194 + $0xf0] sm:$0xff]
      %v232 = vld [vmem:[%s194 + $0xf8] sm:$0xff]
      %v233 = vld [vmem:[%s194 + $0x100] sm:$0x3]
      %v234 = vld [vmem:[%s194 + $0x108] sm:$0xff]
      %v235 = vld [vmem:[%s194 + $0x110] sm:$0xff]
      %v236 = vld [vmem:[%s194 + $0x118] sm:$0x3]
      %v237 = vld [vmem:[%s194 + $0x120] sm:$0xff]
      %v238 = vld [vmem:[%s194 + $0x128] sm:$0xff]
      %v239 = vld [vmem:[%s194 + $0x130] sm:$0x3]
      %v240 = vld [vmem:[%s194 + $0x138] sm:$0xff]
      %v241 = vld [vmem:[%s194 + $0x140] sm:$0xff]
      %v242 = vld [vmem:[%s194 + $0x148] sm:$0x3]
      %v243 = vld [vmem:[%s194 + $0x150] sm:$0xff]
      %v244 = vld [vmem:[%s194 + $0x158] sm:$0xff]
      %v245 = vld [vmem:[%s194 + $0x160] sm:$0x3]
      %v246 = vld [vmem:[%s194 + $0x168] sm:$0xff]
      %v247 = vld [vmem:[%s194 + $0x170] sm:$0xff]
      %v248 = vld [vmem:[%s194 + $0x178] sm:$0x3]
      %v249 = vld [vmem:[%s194 + $0x180] sm:$0xff]
      %v250 = vld [vmem:[%s194 + $0x188] sm:$0xff]
      %v251 = vld [vmem:[%s194 + $0x190] sm:$0x3]
      %v252 = vld [vmem:[%s194 + $0x198] sm:$0xff]
      %v253 = vld [vmem:[%s194 + $0x1a0] sm:$0xff]
      %v254 = vld [vmem:[%s194 + $0x1a8] sm:$0x3]
      %vm303 = vcmask 1046528
      %v304 = vrot.slane %v201, 1
      %v305 = vrot.slane %v202, 1
      %v306 = vsel %vm303, %v304, %v305
      %v307 = vrot.slane %v203, 1
      %v308 = vsel %vm303, %v305, %v307
      %v309 = vrot.slane %v204, 1
      %v310 = vrot.slane %v205, 1
      %v311 = vsel %vm303, %v309, %v310
      %v312 = vrot.slane %v206, 1
      %v313 = vsel %vm303, %v310, %v312
      %v314 = vrot.slane %v207, 1
      %v315 = vrot.slane %v208, 1
      %v316 = vsel %vm303, %v314, %v315
      %v317 = vrot.slane %v209, 1
      %v318 = vsel %vm303, %v315, %v317
      %v319 = vrot.slane %v210, 1
      %v320 = vrot.slane %v211, 1
      %v321 = vsel %vm303, %v319, %v320
      %v322 = vrot.slane %v212, 1
      %v323 = vsel %vm303, %v320, %v322
      %v324 = vrot.slane %v213, 1
      %v325 = vrot.slane %v214, 1
      %v326 = vsel %vm303, %v324, %v325
      %v327 = vrot.slane %v215, 1
      %v328 = vsel %vm303, %v325, %v327
      %v329 = vrot.slane %v216, 1
      %v330 = vrot.slane %v217, 1
      %v331 = vsel %vm303, %v329, %v330
      %v332 = vrot.slane %v218, 1
      %v333 = vsel %vm303, %v330, %v332
      %v334 = vrot.slane %v219, 1
      %v335 = vrot.slane %v220, 1
      %v336 = vsel %vm303, %v334, %v335
      %v337 = vrot.slane %v221, 1
      %v338 = vsel %vm303, %v335, %v337
      %v339 = vrot.slane %v222, 1
      %v340 = vrot.slane %v223, 1
      %v341 = vsel %vm303, %v339, %v340
      %v342 = vrot.slane %v224, 1
      %v343 = vsel %vm303, %v340, %v342
      %v344 = vrot.slane %v225, 1
      %v345 = vrot.slane %v226, 1
      %v346 = vsel %vm303, %v344, %v345
      %v347 = vrot.slane %v227, 1
      %v348 = vsel %vm303, %v345, %v347
      %v349 = vrot.slane %v228, 1
      %v350 = vrot.slane %v229, 1
      %v351 = vsel %vm303, %v349, %v350
      %v352 = vrot.slane %v230, 1
      %v353 = vsel %vm303, %v350, %v352
      %v354 = vrot.slane %v231, 1
      %v355 = vrot.slane %v232, 1
      %v356 = vsel %vm303, %v354, %v355
      %v357 = vrot.slane %v233, 1
      %v358 = vsel %vm303, %v355, %v357
      %v359 = vrot.slane %v234, 1
      %v360 = vrot.slane %v235, 1
      %v361 = vsel %vm303, %v359, %v360
      %v362 = vrot.slane %v236, 1
      %v363 = vsel %vm303, %v360, %v362
      %v364 = vrot.slane %v237, 1
      %v365 = vrot.slane %v238, 1
      %v366 = vsel %vm303, %v364, %v365
      %v367 = vrot.slane %v239, 1
      %v368 = vsel %vm303, %v365, %v367
      %v369 = vrot.slane %v240, 1
      %v370 = vrot.slane %v241, 1
      %v371 = vsel %vm303, %v369, %v370
      %v372 = vrot.slane %v242, 1
      %v373 = vsel %vm303, %v370, %v372
      %v374 = vrot.slane %v243, 1
      %v375 = vrot.slane %v244, 1
      %v376 = vsel %vm303, %v374, %v375
      %v377 = vrot.slane %v245, 1
      %v378 = vsel %vm303, %v375, %v377
      %v379 = vrot.slane %v246, 1
      %v380 = vrot.slane %v247, 1
      %v381 = vsel %vm303, %v379, %v380
      %v382 = vrot.slane %v248, 1
      %v383 = vsel %vm303, %v380, %v382
      %vm384 = vcmask 1045504
      %v385 = vrot.slane %v201, 2
      %v386 = vrot.slane %v202, 2
      %v387 = vsel %vm384, %v385, %v386
      %v388 = vrot.slane %v203, 2
      %v389 = vsel %vm384, %v386, %v388
      %v390 = vrot.slane %v204, 2
      %v391 = vrot.slane %v205, 2
      %v392 = vsel %vm384, %v390, %v391
      %v393 = vrot.slane %v206, 2
      %v394 = vsel %vm384, %v391, %v393
      %v395 = vrot.slane %v207, 2
      %v396 = vrot.slane %v208, 2
      %v397 = vsel %vm384, %v395, %v396
      %v398 = vrot.slane %v209, 2
      %v399 = vsel %vm384, %v396, %v398
      %v400 = vrot.slane %v210, 2
      %v401 = vrot.slane %v211, 2
      %v402 = vsel %vm384, %v400, %v401
      %v403 = vrot.slane %v212, 2
      %v404 = vsel %vm384, %v401, %v403
      %v405 = vrot.slane %v213, 2
      %v406 = vrot.slane %v214, 2
      %v407 = vsel %vm384, %v405, %v406
      %v408 = vrot.slane %v215, 2
      %v409 = vsel %vm384, %v406, %v408
      %v410 = vrot.slane %v216, 2
      %v411 = vrot.slane %v217, 2
      %v412 = vsel %vm384, %v410, %v411
      %v413 = vrot.slane %v218, 2
      %v414 = vsel %vm384, %v411, %v413
      %v415 = vrot.slane %v219, 2
      %v416 = vrot.slane %v220, 2
      %v417 = vsel %vm384, %v415, %v416
      %v418 = vrot.slane %v221, 2
      %v419 = vsel %vm384, %v416, %v418
      %v420 = vrot.slane %v222, 2
      %v421 = vrot.slane %v223, 2
      %v422 = vsel %vm384, %v420, %v421
      %v423 = vrot.slane %v224, 2
      %v424 = vsel %vm384, %v421, %v423
      %v425 = vrot.slane %v225, 2
      %v426 = vrot.slane %v226, 2
      %v427 = vsel %vm384, %v425, %v426
      %v428 = vrot.slane %v227, 2
      %v429 = vsel %vm384, %v426, %v428
      %v430 = vrot.slane %v228, 2
      %v431 = vrot.slane %v229, 2
      %v432 = vsel %vm384, %v430, %v431
      %v433 = vrot.slane %v230, 2
      %v434 = vsel %vm384, %v431, %v433
      %v435 = vrot.slane %v231, 2
      %v436 = vrot.slane %v232, 2
      %v437 = vsel %vm384, %v435, %v436
      %v438 = vrot.slane %v233, 2
      %v439 = vsel %vm384, %v436, %v438
      %v440 = vrot.slane %v234, 2
      %v441 = vrot.slane %v235, 2
      %v442 = vsel %vm384, %v440, %v441
      %v443 = vrot.slane %v236, 2
      %v444 = vsel %vm384, %v441, %v443
      %v445 = vrot.slane %v237, 2
      %v446 = vrot.slane %v238, 2
      %v447 = vsel %vm384, %v445, %v446
      %v448 = vrot.slane %v239, 2
      %v449 = vsel %vm384, %v446, %v448
      %v450 = vrot.slane %v240, 2
      %v451 = vrot.slane %v241, 2
      %v452 = vsel %vm384, %v450, %v451
      %v453 = vrot.slane %v242, 2
      %v454 = vsel %vm384, %v451, %v453
      %v455 = vrot.slane %v243, 2
      %v456 = vrot.slane %v244, 2
      %v457 = vsel %vm384, %v455, %v456
      %v458 = vrot.slane %v245, 2
      %v459 = vsel %vm384, %v456, %v458
      %v460 = vrot.slane %v246, 2
      %v461 = vrot.slane %v247, 2
      %v462 = vsel %vm384, %v460, %v461
      %v463 = vrot.slane %v248, 2
      %v464 = vsel %vm384, %v461, %v463
      %v468 = vrot.slane %v249, 1
      %v469 = vrot.slane %v250, 1
      %v470 = vsel %vm303, %v468, %v469
      %v471 = vrot.slane %v251, 1
      %v472 = vsel %vm303, %v469, %v471
      %v473 = vrot.slane %v249, 2
      %v474 = vrot.slane %v250, 2
      %v475 = vsel %vm384, %v473, %v474
      %v476 = vrot.slane %v251, 2
      %v477 = vsel %vm384, %v474, %v476
      %v481 = vrot.slane %v252, 1
      %v482 = vrot.slane %v253, 1
      %v483 = vsel %vm303, %v481, %v482
      %v484 = vrot.slane %v254, 1
      %v485 = vsel %vm303, %v482, %v484
      %v486 = vrot.slane %v252, 2
      %v487 = vrot.slane %v253, 2
      %v488 = vsel %vm384, %v486, %v487
      %v489 = vrot.slane %v254, 2
      %v490 = vsel %vm384, %v487, %v489
      %491 = vrot.lane.b32.xlu0 %v306, 4
      %v492 = vpop.permute.xlu0 %491
      %493 = vrot.lane.b32.xlu0 %v308, 4
      %v494 = vpop.permute.xlu0 %493
      %495 = vrot.lane.b32.xlu0 %v311, 4
      %v496 = vpop.permute.xlu0 %495
      %497 = vrot.lane.b32.xlu0 %v313, 4
      %v498 = vpop.permute.xlu0 %497
      %499 = vrot.lane.b32.xlu0 %v316, 4
      %v500 = vpop.permute.xlu0 %499
      %501 = vrot.lane.b32.xlu0 %v318, 4
      %v502 = vpop.permute.xlu0 %501
      %503 = vrot.lane.b32.xlu0 %v321, 4
      %v504 = vpop.permute.xlu0 %503
      %505 = vrot.lane.b32.xlu0 %v323, 4
      %v506 = vpop.permute.xlu0 %505
      %507 = vrot.lane.b32.xlu0 %v326, 4
      %v508 = vpop.permute.xlu0 %507
      %509 = vrot.lane.b32.xlu0 %v328, 4
      %v510 = vpop.permute.xlu0 %509
      %511 = vrot.lane.b32.xlu0 %v331, 4
      %v512 = vpop.permute.xlu0 %511
      %513 = vrot.lane.b32.xlu0 %v333, 4
      %v514 = vpop.permute.xlu0 %513
      %515 = vrot.lane.b32.xlu0 %v336, 4
      %v516 = vpop.permute.xlu0 %515
      %517 = vrot.lane.b32.xlu0 %v338, 4
      %v518 = vpop.permute.xlu0 %517
      %519 = vrot.lane.b32.xlu0 %v341, 4
      %v520 = vpop.permute.xlu0 %519
      %521 = vrot.lane.b32.xlu0 %v343, 4
      %v522 = vpop.permute.xlu0 %521
      %523 = vrot.lane.b32.xlu0 %v346, 4
      %v524 = vpop.permute.xlu0 %523
      %525 = vrot.lane.b32.xlu0 %v348, 4
      %v526 = vpop.permute.xlu0 %525
      %527 = vrot.lane.b32.xlu0 %v351, 4
      %v528 = vpop.permute.xlu0 %527
      %529 = vrot.lane.b32.xlu0 %v353, 4
      %v530 = vpop.permute.xlu0 %529
      %531 = vrot.lane.b32.xlu0 %v356, 4
      %v532 = vpop.permute.xlu0 %531
      %533 = vrot.lane.b32.xlu0 %v358, 4
      %v534 = vpop.permute.xlu0 %533
      %535 = vrot.lane.b32.xlu0 %v361, 4
      %v536 = vpop.permute.xlu0 %535
      %537 = vrot.lane.b32.xlu0 %v363, 4
      %v538 = vpop.permute.xlu0 %537
      %539 = vrot.lane.b32.xlu0 %v366, 4
      %v540 = vpop.permute.xlu0 %539
      %541 = vrot.lane.b32.xlu0 %v368, 4
      %v542 = vpop.permute.xlu0 %541
      %543 = vrot.lane.b32.xlu0 %v371, 4
      %v544 = vpop.permute.xlu0 %543
      %545 = vrot.lane.b32.xlu0 %v373, 4
      %v546 = vpop.permute.xlu0 %545
      %547 = vrot.lane.b32.xlu0 %v376, 4
      %v548 = vpop.permute.xlu0 %547
      %549 = vrot.lane.b32.xlu0 %v378, 4
      %v550 = vpop.permute.xlu0 %549
      %551 = vrot.lane.b32.xlu0 %v381, 4
      %v552 = vpop.permute.xlu0 %551
      %553 = vrot.lane.b32.xlu0 %v383, 4
      %v554 = vpop.permute.xlu0 %553
      %587 = vrot.lane.b32.xlu0 %v387, 8
      %v588 = vpop.permute.xlu0 %587
      %589 = vrot.lane.b32.xlu0 %v389, 8
      %v590 = vpop.permute.xlu0 %589
      %591 = vrot.lane.b32.xlu0 %v392, 8
      %v592 = vpop.permute.xlu0 %591
      %593 = vrot.lane.b32.xlu0 %v394, 8
      %v594 = vpop.permute.xlu0 %593
      %595 = vrot.lane.b32.xlu0 %v397, 8
      %v596 = vpop.permute.xlu0 %595
      %597 = vrot.lane.b32.xlu0 %v399, 8
      %v598 = vpop.permute.xlu0 %597
      %599 = vrot.lane.b32.xlu0 %v402, 8
      %v600 = vpop.permute.xlu0 %599
      %601 = vrot.lane.b32.xlu0 %v404, 8
      %v602 = vpop.permute.xlu0 %601
      %603 = vrot.lane.b32.xlu0 %v407, 8
      %v604 = vpop.permute.xlu0 %603
      %605 = vrot.lane.b32.xlu0 %v409, 8
      %v606 = vpop.permute.xlu0 %605
      %607 = vrot.lane.b32.xlu0 %v412, 8
      %v608 = vpop.permute.xlu0 %607
      %609 = vrot.lane.b32.xlu0 %v414, 8
      %v610 = vpop.permute.xlu0 %609
      %611 = vrot.lane.b32.xlu0 %v417, 8
      %v612 = vpop.permute.xlu0 %611
      %613 = vrot.lane.b32.xlu0 %v419, 8
      %v614 = vpop.permute.xlu0 %613
      %615 = vrot.lane.b32.xlu0 %v422, 8
      %v616 = vpop.permute.xlu0 %615
      %617 = vrot.lane.b32.xlu0 %v424, 8
      %v618 = vpop.permute.xlu0 %617
      %619 = vrot.lane.b32.xlu0 %v427, 8
      %v620 = vpop.permute.xlu0 %619
      %621 = vrot.lane.b32.xlu0 %v429, 8
      %v622 = vpop.permute.xlu0 %621
      %623 = vrot.lane.b32.xlu0 %v432, 8
      %v624 = vpop.permute.xlu0 %623
      %625 = vrot.lane.b32.xlu0 %v434, 8
      %v626 = vpop.permute.xlu0 %625
      %627 = vrot.lane.b32.xlu0 %v437, 8
      %v628 = vpop.permute.xlu0 %627
      %629 = vrot.lane.b32.xlu0 %v439, 8
      %v630 = vpop.permute.xlu0 %629
      %631 = vrot.lane.b32.xlu0 %v442, 8
      %v632 = vpop.permute.xlu0 %631
      %633 = vrot.lane.b32.xlu0 %v444, 8
      %v634 = vpop.permute.xlu0 %633
      %635 = vrot.lane.b32.xlu0 %v447, 8
      %v636 = vpop.permute.xlu0 %635
      %637 = vrot.lane.b32.xlu0 %v449, 8
      %v638 = vpop.permute.xlu0 %637
      %639 = vrot.lane.b32.xlu0 %v452, 8
      %v640 = vpop.permute.xlu0 %639
      %641 = vrot.lane.b32.xlu0 %v454, 8
      %v642 = vpop.permute.xlu0 %641
      %643 = vrot.lane.b32.xlu0 %v457, 8
      %v644 = vpop.permute.xlu0 %643
      %645 = vrot.lane.b32.xlu0 %v459, 8
      %v646 = vpop.permute.xlu0 %645
      %647 = vrot.lane.b32.xlu0 %v462, 8
      %v648 = vpop.permute.xlu0 %647
      %649 = vrot.lane.b32.xlu0 %v464, 8
      %v650 = vpop.permute.xlu0 %649
      %683 = vrot.lane.b32.xlu0 %v204, 12
      %v684 = vpop.permute.xlu0 %683
      %685 = vrot.lane.b32.xlu0 %v205, 12
      %v686 = vpop.permute.xlu0 %685
      %687 = vrot.lane.b32.xlu0 %v207, 12
      %v688 = vpop.permute.xlu0 %687
      %689 = vrot.lane.b32.xlu0 %v208, 12
      %v690 = vpop.permute.xlu0 %689
      %691 = vrot.lane.b32.xlu0 %v210, 12
      %v692 = vpop.permute.xlu0 %691
      %693 = vrot.lane.b32.xlu0 %v211, 12
      %v694 = vpop.permute.xlu0 %693
      %695 = vrot.lane.b32.xlu0 %v213, 12
      %v696 = vpop.permute.xlu0 %695
      %697 = vrot.lane.b32.xlu0 %v214, 12
      %v698 = vpop.permute.xlu0 %697
      %699 = vrot.lane.b32.xlu0 %v216, 12
      %v700 = vpop.permute.xlu0 %699
      %701 = vrot.lane.b32.xlu0 %v217, 12
      %v702 = vpop.permute.xlu0 %701
      %703 = vrot.lane.b32.xlu0 %v219, 12
      %v704 = vpop.permute.xlu0 %703
      %705 = vrot.lane.b32.xlu0 %v220, 12
      %v706 = vpop.permute.xlu0 %705
      %707 = vrot.lane.b32.xlu0 %v222, 12
      %v708 = vpop.permute.xlu0 %707
      %709 = vrot.lane.b32.xlu0 %v223, 12
      %v710 = vpop.permute.xlu0 %709
      %711 = vrot.lane.b32.xlu0 %v225, 12
      %v712 = vpop.permute.xlu0 %711
      %713 = vrot.lane.b32.xlu0 %v226, 12
      %v714 = vpop.permute.xlu0 %713
      %715 = vrot.lane.b32.xlu0 %v228, 12
      %v716 = vpop.permute.xlu0 %715
      %717 = vrot.lane.b32.xlu0 %v229, 12
      %v718 = vpop.permute.xlu0 %717
      %719 = vrot.lane.b32.xlu0 %v231, 12
      %v720 = vpop.permute.xlu0 %719
      %721 = vrot.lane.b32.xlu0 %v232, 12
      %v722 = vpop.permute.xlu0 %721
      %723 = vrot.lane.b32.xlu0 %v234, 12
      %v724 = vpop.permute.xlu0 %723
      %725 = vrot.lane.b32.xlu0 %v235, 12
      %v726 = vpop.permute.xlu0 %725
      %727 = vrot.lane.b32.xlu0 %v237, 12
      %v728 = vpop.permute.xlu0 %727
      %729 = vrot.lane.b32.xlu0 %v238, 12
      %v730 = vpop.permute.xlu0 %729
      %731 = vrot.lane.b32.xlu0 %v240, 12
      %v732 = vpop.permute.xlu0 %731
      %733 = vrot.lane.b32.xlu0 %v241, 12
      %v734 = vpop.permute.xlu0 %733
      %735 = vrot.lane.b32.xlu0 %v243, 12
      %v736 = vpop.permute.xlu0 %735
      %737 = vrot.lane.b32.xlu0 %v244, 12
      %v738 = vpop.permute.xlu0 %737
      %739 = vrot.lane.b32.xlu0 %v246, 12
      %v740 = vpop.permute.xlu0 %739
      %741 = vrot.lane.b32.xlu0 %v247, 12
      %v742 = vpop.permute.xlu0 %741
      %743 = vrot.lane.b32.xlu0 %v249, 12
      %v744 = vpop.permute.xlu0 %743
      %745 = vrot.lane.b32.xlu0 %v250, 12
      %v746 = vpop.permute.xlu0 %745
      %779 = vrot.lane.b32.xlu0 %v311, 16
      %v780 = vpop.permute.xlu0 %779
      %781 = vrot.lane.b32.xlu0 %v313, 16
      %v782 = vpop.permute.xlu0 %781
      %783 = vrot.lane.b32.xlu0 %v316, 16
      %v784 = vpop.permute.xlu0 %783
      %785 = vrot.lane.b32.xlu0 %v318, 16
      %v786 = vpop.permute.xlu0 %785
      %787 = vrot.lane.b32.xlu0 %v321, 16
      %v788 = vpop.permute.xlu0 %787
      %789 = vrot.lane.b32.xlu0 %v323, 16
      %v790 = vpop.permute.xlu0 %789
      %791 = vrot.lane.b32.xlu0 %v326, 16
      %v792 = vpop.permute.xlu0 %791
      %793 = vrot.lane.b32.xlu0 %v328, 16
      %v794 = vpop.permute.xlu0 %793
      %795 = vrot.lane.b32.xlu0 %v331, 16
      %v796 = vpop.permute.xlu0 %795
      %797 = vrot.lane.b32.xlu0 %v333, 16
      %v798 = vpop.permute.xlu0 %797
      %799 = vrot.lane.b32.xlu0 %v336, 16
      %v800 = vpop.permute.xlu0 %799
      %801 = vrot.lane.b32.xlu0 %v338, 16
      %v802 = vpop.permute.xlu0 %801
      %803 = vrot.lane.b32.xlu0 %v341, 16
      %v804 = vpop.permute.xlu0 %803
      %805 = vrot.lane.b32.xlu0 %v343, 16
      %v806 = vpop.permute.xlu0 %805
      %807 = vrot.lane.b32.xlu0 %v346, 16
      %v808 = vpop.permute.xlu0 %807
      %809 = vrot.lane.b32.xlu0 %v348, 16
      %v810 = vpop.permute.xlu0 %809
      %811 = vrot.lane.b32.xlu0 %v351, 16
      %v812 = vpop.permute.xlu0 %811
      %813 = vrot.lane.b32.xlu0 %v353, 16
      %v814 = vpop.permute.xlu0 %813
      %815 = vrot.lane.b32.xlu0 %v356, 16
      %v816 = vpop.permute.xlu0 %815
      %817 = vrot.lane.b32.xlu0 %v358, 16
      %v818 = vpop.permute.xlu0 %817
      %819 = vrot.lane.b32.xlu0 %v361, 16
      %v820 = vpop.permute.xlu0 %819
      %821 = vrot.lane.b32.xlu0 %v363, 16
      %v822 = vpop.permute.xlu0 %821
      %823 = vrot.lane.b32.xlu0 %v366, 16
      %v824 = vpop.permute.xlu0 %823
      %825 = vrot.lane.b32.xlu0 %v368, 16
      %v826 = vpop.permute.xlu0 %825
      %827 = vrot.lane.b32.xlu0 %v371, 16
      %v828 = vpop.permute.xlu0 %827
      %829 = vrot.lane.b32.xlu0 %v373, 16
      %v830 = vpop.permute.xlu0 %829
      %831 = vrot.lane.b32.xlu0 %v376, 16
      %v832 = vpop.permute.xlu0 %831
      %833 = vrot.lane.b32.xlu0 %v378, 16
      %v834 = vpop.permute.xlu0 %833
      %835 = vrot.lane.b32.xlu0 %v381, 16
      %v836 = vpop.permute.xlu0 %835
      %837 = vrot.lane.b32.xlu0 %v383, 16
      %v838 = vpop.permute.xlu0 %837
      %839 = vrot.lane.b32.xlu0 %v470, 16
      %v840 = vpop.permute.xlu0 %839
      %841 = vrot.lane.b32.xlu0 %v472, 16
      %v842 = vpop.permute.xlu0 %841
      %875 = vrot.lane.b32.xlu0 %v392, 20
      %v876 = vpop.permute.xlu0 %875
      %877 = vrot.lane.b32.xlu0 %v394, 20
      %v878 = vpop.permute.xlu0 %877
      %879 = vrot.lane.b32.xlu0 %v397, 20
      %v880 = vpop.permute.xlu0 %879
      %881 = vrot.lane.b32.xlu0 %v399, 20
      %v882 = vpop.permute.xlu0 %881
      %883 = vrot.lane.b32.xlu0 %v402, 20
      %v884 = vpop.permute.xlu0 %883
      %885 = vrot.lane.b32.xlu0 %v404, 20
      %v886 = vpop.permute.xlu0 %885
      %887 = vrot.lane.b32.xlu0 %v407, 20
      %v888 = vpop.permute.xlu0 %887
      %889 = vrot.lane.b32.xlu0 %v409, 20
      %v890 = vpop.permute.xlu0 %889
      %891 = vrot.lane.b32.xlu0 %v412, 20
      %v892 = vpop.permute.xlu0 %891
      %893 = vrot.lane.b32.xlu0 %v414, 20
      %v894 = vpop.permute.xlu0 %893
      %895 = vrot.lane.b32.xlu0 %v417, 20
      %v896 = vpop.permute.xlu0 %895
      %897 = vrot.lane.b32.xlu0 %v419, 20
      %v898 = vpop.permute.xlu0 %897
      %899 = vrot.lane.b32.xlu0 %v422, 20
      %v900 = vpop.permute.xlu0 %899
      %901 = vrot.lane.b32.xlu0 %v424, 20
      %v902 = vpop.permute.xlu0 %901
      %903 = vrot.lane.b32.xlu0 %v427, 20
      %v904 = vpop.permute.xlu0 %903
      %905 = vrot.lane.b32.xlu0 %v429, 20
      %v906 = vpop.permute.xlu0 %905
      %907 = vrot.lane.b32.xlu0 %v432, 20
      %v908 = vpop.permute.xlu0 %907
      %909 = vrot.lane.b32.xlu0 %v434, 20
      %v910 = vpop.permute.xlu0 %909
      %911 = vrot.lane.b32.xlu0 %v437, 20
      %v912 = vpop.permute.xlu0 %911
      %913 = vrot.lane.b32.xlu0 %v439, 20
      %v914 = vpop.permute.xlu0 %913
      %915 = vrot.lane.b32.xlu0 %v442, 20
      %v916 = vpop.permute.xlu0 %915
      %917 = vrot.lane.b32.xlu0 %v444, 20
      %v918 = vpop.permute.xlu0 %917
      %919 = vrot.lane.b32.xlu0 %v447, 20
      %v920 = vpop.permute.xlu0 %919
      %921 = vrot.lane.b32.xlu0 %v449, 20
      %v922 = vpop.permute.xlu0 %921
      %923 = vrot.lane.b32.xlu0 %v452, 20
      %v924 = vpop.permute.xlu0 %923
      %925 = vrot.lane.b32.xlu0 %v454, 20
      %v926 = vpop.permute.xlu0 %925
      %927 = vrot.lane.b32.xlu0 %v457, 20
      %v928 = vpop.permute.xlu0 %927
      %929 = vrot.lane.b32.xlu0 %v459, 20
      %v930 = vpop.permute.xlu0 %929
      %931 = vrot.lane.b32.xlu0 %v462, 20
      %v932 = vpop.permute.xlu0 %931
      %933 = vrot.lane.b32.xlu0 %v464, 20
      %v934 = vpop.permute.xlu0 %933
      %935 = vrot.lane.b32.xlu0 %v475, 20
      %v936 = vpop.permute.xlu0 %935
      %937 = vrot.lane.b32.xlu0 %v477, 20
      %v938 = vpop.permute.xlu0 %937
      %971 = vrot.lane.b32.xlu0 %v207, 24
      %v972 = vpop.permute.xlu0 %971
      %973 = vrot.lane.b32.xlu0 %v208, 24
      %v974 = vpop.permute.xlu0 %973
      %975 = vrot.lane.b32.xlu0 %v210, 24
      %v976 = vpop.permute.xlu0 %975
      %977 = vrot.lane.b32.xlu0 %v211, 24
      %v978 = vpop.permute.xlu0 %977
      %979 = vrot.lane.b32.xlu0 %v213, 24
      %v980 = vpop.permute.xlu0 %979
      %981 = vrot.lane.b32.xlu0 %v214, 24
      %v982 = vpop.permute.xlu0 %981
      %983 = vrot.lane.b32.xlu0 %v216, 24
      %v984 = vpop.permute.xlu0 %983
      %985 = vrot.lane.b32.xlu0 %v217, 24
      %v986 = vpop.permute.xlu0 %985
      %987 = vrot.lane.b32.xlu0 %v219, 24
      %v988 = vpop.permute.xlu0 %987
      %989 = vrot.lane.b32.xlu0 %v220, 24
      %v990 = vpop.permute.xlu0 %989
      %991 = vrot.lane.b32.xlu0 %v222, 24
      %v992 = vpop.permute.xlu0 %991
      %993 = vrot.lane.b32.xlu0 %v223, 24
      %v994 = vpop.permute.xlu0 %993
      %995 = vrot.lane.b32.xlu0 %v225, 24
      %v996 = vpop.permute.xlu0 %995
      %997 = vrot.lane.b32.xlu0 %v226, 24
      %v998 = vpop.permute.xlu0 %997
      %999 = vrot.lane.b32.xlu0 %v228, 24
      %v1000 = vpop.permute.xlu0 %999
      %1001 = vrot.lane.b32.xlu0 %v229, 24
      %v1002 = vpop.permute.xlu0 %1001
      %1003 = vrot.lane.b32.xlu0 %v231, 24
      %v1004 = vpop.permute.xlu0 %1003
      %1005 = vrot.lane.b32.xlu0 %v232, 24
      %v1006 = vpop.permute.xlu0 %1005
      %1007 = vrot.lane.b32.xlu0 %v234, 24
      %v1008 = vpop.permute.xlu0 %1007
      %1009 = vrot.lane.b32.xlu0 %v235, 24
      %v1010 = vpop.permute.xlu0 %1009
      %1011 = vrot.lane.b32.xlu0 %v237, 24
      %v1012 = vpop.permute.xlu0 %1011
      %1013 = vrot.lane.b32.xlu0 %v238, 24
      %v1014 = vpop.permute.xlu0 %1013
      %1015 = vrot.lane.b32.xlu0 %v240, 24
      %v1016 = vpop.permute.xlu0 %1015
      %1017 = vrot.lane.b32.xlu0 %v241, 24
      %v1018 = vpop.permute.xlu0 %1017
      %1019 = vrot.lane.b32.xlu0 %v243, 24
      %v1020 = vpop.permute.xlu0 %1019
      %1021 = vrot.lane.b32.xlu0 %v244, 24
      %v1022 = vpop.permute.xlu0 %1021
      %1023 = vrot.lane.b32.xlu0 %v246, 24
      %v1024 = vpop.permute.xlu0 %1023
      %1025 = vrot.lane.b32.xlu0 %v247, 24
      %v1026 = vpop.permute.xlu0 %1025
      %1027 = vrot.lane.b32.xlu0 %v249, 24
      %v1028 = vpop.permute.xlu0 %1027
      %1029 = vrot.lane.b32.xlu0 %v250, 24
      %v1030 = vpop.permute.xlu0 %1029
      %1031 = vrot.lane.b32.xlu0 %v252, 24
      %v1032 = vpop.permute.xlu0 %1031
      %1033 = vrot.lane.b32.xlu0 %v253, 24
      %v1034 = vpop.permute.xlu0 %1033
      %1067 = vrot.lane.b32.xlu0 %v316, 28
      %v1068 = vpop.permute.xlu0 %1067
      %1069 = vrot.lane.b32.xlu0 %v318, 28
      %v1070 = vpop.permute.xlu0 %1069
      %1071 = vrot.lane.b32.xlu0 %v321, 28
      %v1072 = vpop.permute.xlu0 %1071
      %1073 = vrot.lane.b32.xlu0 %v323, 28
      %v1074 = vpop.permute.xlu0 %1073
      %1075 = vrot.lane.b32.xlu0 %v326, 28
      %v1076 = vpop.permute.xlu0 %1075
      %1077 = vrot.lane.b32.xlu0 %v328, 28
      %v1078 = vpop.permute.xlu0 %1077
      %1079 = vrot.lane.b32.xlu0 %v331, 28
      %v1080 = vpop.permute.xlu0 %1079
      %1081 = vrot.lane.b32.xlu0 %v333, 28
      %v1082 = vpop.permute.xlu0 %1081
      %1083 = vrot.lane.b32.xlu0 %v336, 28
      %v1084 = vpop.permute.xlu0 %1083
      %1085 = vrot.lane.b32.xlu0 %v338, 28
      %v1086 = vpop.permute.xlu0 %1085
      %1087 = vrot.lane.b32.xlu0 %v341, 28
      %v1088 = vpop.permute.xlu0 %1087
      %1089 = vrot.lane.b32.xlu0 %v343, 28
      %v1090 = vpop.permute.xlu0 %1089
      %1091 = vrot.lane.b32.xlu0 %v346, 28
      %v1092 = vpop.permute.xlu0 %1091
      %1093 = vrot.lane.b32.xlu0 %v348, 28
      %v1094 = vpop.permute.xlu0 %1093
      %1095 = vrot.lane.b32.xlu0 %v351, 28
      %v1096 = vpop.permute.xlu0 %1095
      %1097 = vrot.lane.b32.xlu0 %v353, 28
      %v1098 = vpop.permute.xlu0 %1097
      %1099 = vrot.lane.b32.xlu0 %v356, 28
      %v1100 = vpop.permute.xlu0 %1099
      %1101 = vrot.lane.b32.xlu0 %v358, 28
      %v1102 = vpop.permute.xlu0 %1101
      %1103 = vrot.lane.b32.xlu0 %v361, 28
      %v1104 = vpop.permute.xlu0 %1103
      %1105 = vrot.lane.b32.xlu0 %v363, 28
      %v1106 = vpop.permute.xlu0 %1105
      %1107 = vrot.lane.b32.xlu0 %v366, 28
      %v1108 = vpop.permute.xlu0 %1107
      %1109 = vrot.lane.b32.xlu0 %v368, 28
      %v1110 = vpop.permute.xlu0 %1109
      %1111 = vrot.lane.b32.xlu0 %v371, 28
      %v1112 = vpop.permute.xlu0 %1111
      %1113 = vrot.lane.b32.xlu0 %v373, 28
      %v1114 = vpop.permute.xlu0 %1113
      %1115 = vrot.lane.b32.xlu0 %v376, 28
      %v1116 = vpop.permute.xlu0 %1115
      %1117 = vrot.lane.b32.xlu0 %v378, 28
      %v1118 = vpop.permute.xlu0 %1117
      %1119 = vrot.lane.b32.xlu0 %v381, 28
      %v1120 = vpop.permute.xlu0 %1119
      %1121 = vrot.lane.b32.xlu0 %v383, 28
      %v1122 = vpop.permute.xlu0 %1121
      %1123 = vrot.lane.b32.xlu0 %v470, 28
      %v1124 = vpop.permute.xlu0 %1123
      %1125 = vrot.lane.b32.xlu0 %v472, 28
      %v1126 = vpop.permute.xlu0 %1125
      %1127 = vrot.lane.b32.xlu0 %v483, 28
      %v1128 = vpop.permute.xlu0 %1127
      %1129 = vrot.lane.b32.xlu0 %v485, 28
      %v1130 = vpop.permute.xlu0 %1129
      %1163 = vrot.lane.b32.xlu0 %v397, 32
      %v1164 = vpop.permute.xlu0 %1163
      %1165 = vrot.lane.b32.xlu0 %v399, 32
      %v1166 = vpop.permute.xlu0 %1165
      %1167 = vrot.lane.b32.xlu0 %v402, 32
      %v1168 = vpop.permute.xlu0 %1167
      %1169 = vrot.lane.b32.xlu0 %v404, 32
      %v1170 = vpop.permute.xlu0 %1169
      %1171 = vrot.lane.b32.xlu0 %v407, 32
      %v1172 = vpop.permute.xlu0 %1171
      %1173 = vrot.lane.b32.xlu0 %v409, 32
      %v1174 = vpop.permute.xlu0 %1173
      %1175 = vrot.lane.b32.xlu0 %v412, 32
      %v1176 = vpop.permute.xlu0 %1175
      %1177 = vrot.lane.b32.xlu0 %v414, 32
      %v1178 = vpop.permute.xlu0 %1177
      %1179 = vrot.lane.b32.xlu0 %v417, 32
      %v1180 = vpop.permute.xlu0 %1179
      %1181 = vrot.lane.b32.xlu0 %v419, 32
      %v1182 = vpop.permute.xlu0 %1181
      %1183 = vrot.lane.b32.xlu0 %v422, 32
      %v1184 = vpop.permute.xlu0 %1183
      %1185 = vrot.lane.b32.xlu0 %v424, 32
      %v1186 = vpop.permute.xlu0 %1185
      %1187 = vrot.lane.b32.xlu0 %v427, 32
      %v1188 = vpop.permute.xlu0 %1187
      %1189 = vrot.lane.b32.xlu0 %v429, 32
      %v1190 = vpop.permute.xlu0 %1189
      %1191 = vrot.lane.b32.xlu0 %v432, 32
      %v1192 = vpop.permute.xlu0 %1191
      %1193 = vrot.lane.b32.xlu0 %v434, 32
      %v1194 = vpop.permute.xlu0 %1193
      %1195 = vrot.lane.b32.xlu0 %v437, 32
      %v1196 = vpop.permute.xlu0 %1195
      %1197 = vrot.lane.b32.xlu0 %v439, 32
      %v1198 = vpop.permute.xlu0 %1197
      %1199 = vrot.lane.b32.xlu0 %v442, 32
      %v1200 = vpop.permute.xlu0 %1199
      %1201 = vrot.lane.b32.xlu0 %v444, 32
      %v1202 = vpop.permute.xlu0 %1201
      %1203 = vrot.lane.b32.xlu0 %v447, 32
      %v1204 = vpop.permute.xlu0 %1203
      %1205 = vrot.lane.b32.xlu0 %v449, 32
      %v1206 = vpop.permute.xlu0 %1205
      %1207 = vrot.lane.b32.xlu0 %v452, 32
      %v1208 = vpop.permute.xlu0 %1207
      %1209 = vrot.lane.b32.xlu0 %v454, 32
      %v1210 = vpop.permute.xlu0 %1209
      %1211 = vrot.lane.b32.xlu0 %v457, 32
      %v1212 = vpop.permute.xlu0 %1211
      %1213 = vrot.lane.b32.xlu0 %v459, 32
      %v1214 = vpop.permute.xlu0 %1213
      %1215 = vrot.lane.b32.xlu0 %v462, 32
      %v1216 = vpop.permute.xlu0 %1215
      %1217 = vrot.lane.b32.xlu0 %v464, 32
      %v1218 = vpop.permute.xlu0 %1217
      %1219 = vrot.lane.b32.xlu0 %v475, 32
      %v1220 = vpop.permute.xlu0 %1219
      %1221 = vrot.lane.b32.xlu0 %v477, 32
      %v1222 = vpop.permute.xlu0 %1221
      %1223 = vrot.lane.b32.xlu0 %v488, 32
      %v1224 = vpop.permute.xlu0 %1223
      %1225 = vrot.lane.b32.xlu0 %v490, 32
      %v1226 = vpop.permute.xlu0 %1225
      %vm1259 = vcmask 31744
      %v1260 = vsel %vm1259, %v201, %v492
      %v1261 = vsel %vm1259, %v202, %v494
      %v1262 = vsel %vm1259, %v204, %v496
      %v1263 = vsel %vm1259, %v205, %v498
      %v1264 = vsel %vm1259, %v207, %v500
      %v1265 = vsel %vm1259, %v208, %v502
      %v1266 = vsel %vm1259, %v210, %v504
      %v1267 = vsel %vm1259, %v211, %v506
      %v1268 = vsel %vm1259, %v213, %v508
      %v1269 = vsel %vm1259, %v214, %v510
      %v1270 = vsel %vm1259, %v216, %v512
      %v1271 = vsel %vm1259, %v217, %v514
      %v1272 = vsel %vm1259, %v219, %v516
      %v1273 = vsel %vm1259, %v220, %v518
      %v1274 = vsel %vm1259, %v222, %v520
      %v1275 = vsel %vm1259, %v223, %v522
      %v1276 = vsel %vm1259, %v225, %v524
      %v1277 = vsel %vm1259, %v226, %v526
      %v1278 = vsel %vm1259, %v228, %v528
      %v1279 = vsel %vm1259, %v229, %v530
      %v1280 = vsel %vm1259, %v231, %v532
      %v1281 = vsel %vm1259, %v232, %v534
      %v1282 = vsel %vm1259, %v234, %v536
      %v1283 = vsel %vm1259, %v235, %v538
      %v1284 = vsel %vm1259, %v237, %v540
      %v1285 = vsel %vm1259, %v238, %v542
      %v1286 = vsel %vm1259, %v240, %v544
      %v1287 = vsel %vm1259, %v241, %v546
      %v1288 = vsel %vm1259, %v243, %v548
      %v1289 = vsel %vm1259, %v244, %v550
      %v1290 = vsel %vm1259, %v246, %v552
      %v1291 = vsel %vm1259, %v247, %v554
      %vm1292 = vcmask 64512
      %v1293 = vsel %vm1292, %v1260, %v588
      %v1294 = vsel %vm1292, %v1261, %v590
      %v1295 = vsel %vm1292, %v1262, %v592
      %v1296 = vsel %vm1292, %v1263, %v594
      %v1297 = vsel %vm1292, %v1264, %v596
      %v1298 = vsel %vm1292, %v1265, %v598
      %v1299 = vsel %vm1292, %v1266, %v600
      %v1300 = vsel %vm1292, %v1267, %v602
      %v1301 = vsel %vm1292, %v1268, %v604
      %v1302 = vsel %vm1292, %v1269, %v606
      %v1303 = vsel %vm1292, %v1270, %v608
      %v1304 = vsel %vm1292, %v1271, %v610
      %v1305 = vsel %vm1292, %v1272, %v612
      %v1306 = vsel %vm1292, %v1273, %v614
      %v1307 = vsel %vm1292, %v1274, %v616
      %v1308 = vsel %vm1292, %v1275, %v618
      %v1309 = vsel %vm1292, %v1276, %v620
      %v1310 = vsel %vm1292, %v1277, %v622
      %v1311 = vsel %vm1292, %v1278, %v624
      %v1312 = vsel %vm1292, %v1279, %v626
      %v1313 = vsel %vm1292, %v1280, %v628
      %v1314 = vsel %vm1292, %v1281, %v630
      %v1315 = vsel %vm1292, %v1282, %v632
      %v1316 = vsel %vm1292, %v1283, %v634
      %v1317 = vsel %vm1292, %v1284, %v636
      %v1318 = vsel %vm1292, %v1285, %v638
      %v1319 = vsel %vm1292, %v1286, %v640
      %v1320 = vsel %vm1292, %v1287, %v642
      %v1321 = vsel %vm1292, %v1288, %v644
      %v1322 = vsel %vm1292, %v1289, %v646
      %v1323 = vsel %vm1292, %v1290, %v648
      %v1324 = vsel %vm1292, %v1291, %v650
      %vm1325 = vcmask 97280
      %v1326 = vsel %vm1325, %v1293, %v684
      %v1327 = vsel %vm1325, %v1294, %v686
      %v1328 = vsel %vm1325, %v1295, %v688
      %v1329 = vsel %vm1325, %v1296, %v690
      %v1330 = vsel %vm1325, %v1297, %v692
      %v1331 = vsel %vm1325, %v1298, %v694
      %v1332 = vsel %vm1325, %v1299, %v696
      %v1333 = vsel %vm1325, %v1300, %v698
      %v1334 = vsel %vm1325, %v1301, %v700
      %v1335 = vsel %vm1325, %v1302, %v702
      %v1336 = vsel %vm1325, %v1303, %v704
      %v1337 = vsel %vm1325, %v1304, %v706
      %v1338 = vsel %vm1325, %v1305, %v708
      %v1339 = vsel %vm1325, %v1306, %v710
      %v1340 = vsel %vm1325, %v1307, %v712
      %v1341 = vsel %vm1325, %v1308, %v714
      %v1342 = vsel %vm1325, %v1309, %v716
      %v1343 = vsel %vm1325, %v1310, %v718
      %v1344 = vsel %vm1325, %v1311, %v720
      %v1345 = vsel %vm1325, %v1312, %v722
      %v1346 = vsel %vm1325, %v1313, %v724
      %v1347 = vsel %vm1325, %v1314, %v726
      %v1348 = vsel %vm1325, %v1315, %v728
      %v1349 = vsel %vm1325, %v1316, %v730
      %v1350 = vsel %vm1325, %v1317, %v732
      %v1351 = vsel %vm1325, %v1318, %v734
      %v1352 = vsel %vm1325, %v1319, %v736
      %v1353 = vsel %vm1325, %v1320, %v738
      %v1354 = vsel %vm1325, %v1321, %v740
      %v1355 = vsel %vm1325, %v1322, %v742
      %v1356 = vsel %vm1325, %v1323, %v744
      %v1357 = vsel %vm1325, %v1324, %v746
      %vm1358 = vcmask 130048
      %v1359 = vsel %vm1358, %v1326, %v780
      %v1360 = vsel %vm1358, %v1327, %v782
      %v1361 = vsel %vm1358, %v1328, %v784
      %v1362 = vsel %vm1358, %v1329, %v786
      %v1363 = vsel %vm1358, %v1330, %v788
      %v1364 = vsel %vm1358, %v1331, %v790
      %v1365 = vsel %vm1358, %v1332, %v792
      %v1366 = vsel %vm1358, %v1333, %v794
      %v1367 = vsel %vm1358, %v1334, %v796
      %v1368 = vsel %vm1358, %v1335, %v798
      %v1369 = vsel %vm1358, %v1336, %v800
      %v1370 = vsel %vm1358, %v1337, %v802
      %v1371 = vsel %vm1358, %v1338, %v804
      %v1372 = vsel %vm1358, %v1339, %v806
      %v1373 = vsel %vm1358, %v1340, %v808
      %v1374 = vsel %vm1358, %v1341, %v810
      %v1375 = vsel %vm1358, %v1342, %v812
      %v1376 = vsel %vm1358, %v1343, %v814
      %v1377 = vsel %vm1358, %v1344, %v816
      %v1378 = vsel %vm1358, %v1345, %v818
      %v1379 = vsel %vm1358, %v1346, %v820
      %v1380 = vsel %vm1358, %v1347, %v822
      %v1381 = vsel %vm1358, %v1348, %v824
      %v1382 = vsel %vm1358, %v1349, %v826
      %v1383 = vsel %vm1358, %v1350, %v828
      %v1384 = vsel %vm1358, %v1351, %v830
      %v1385 = vsel %vm1358, %v1352, %v832
      %v1386 = vsel %vm1358, %v1353, %v834
      %v1387 = vsel %vm1358, %v1354, %v836
      %v1388 = vsel %vm1358, %v1355, %v838
      %v1389 = vsel %vm1358, %v1356, %v840
      %v1390 = vsel %vm1358, %v1357, %v842
      %vm1391 = vcmask 162816
      %v1392 = vsel %vm1391, %v1359, %v876
      %v1393 = vsel %vm1391, %v1360, %v878
      %v1394 = vsel %vm1391, %v1361, %v880
      %v1395 = vsel %vm1391, %v1362, %v882
      %v1396 = vsel %vm1391, %v1363, %v884
      %v1397 = vsel %vm1391, %v1364, %v886
      %v1398 = vsel %vm1391, %v1365, %v888
      %v1399 = vsel %vm1391, %v1366, %v890
      %v1400 = vsel %vm1391, %v1367, %v892
      %v1401 = vsel %vm1391, %v1368, %v894
      %v1402 = vsel %vm1391, %v1369, %v896
      %v1403 = vsel %vm1391, %v1370, %v898
      %v1404 = vsel %vm1391, %v1371, %v900
      %v1405 = vsel %vm1391, %v1372, %v902
      %v1406 = vsel %vm1391, %v1373, %v904
      %v1407 = vsel %vm1391, %v1374, %v906
      %v1408 = vsel %vm1391, %v1375, %v908
      %v1409 = vsel %vm1391, %v1376, %v910
      %v1410 = vsel %vm1391, %v1377, %v912
      %v1411 = vsel %vm1391, %v1378, %v914
      %v1412 = vsel %vm1391, %v1379, %v916
      %v1413 = vsel %vm1391, %v1380, %v918
      %v1414 = vsel %vm1391, %v1381, %v920
      %v1415 = vsel %vm1391, %v1382, %v922
      %v1416 = vsel %vm1391, %v1383, %v924
      %v1417 = vsel %vm1391, %v1384, %v926
      %v1418 = vsel %vm1391, %v1385, %v928
      %v1419 = vsel %vm1391, %v1386, %v930
      %v1420 = vsel %vm1391, %v1387, %v932
      %v1421 = vsel %vm1391, %v1388, %v934
      %v1422 = vsel %vm1391, %v1389, %v936
      %v1423 = vsel %vm1391, %v1390, %v938
      %vm1424 = vcmask 195584
      %v1425 = vsel %vm1424, %v1392, %v972
      %v1426 = vsel %vm1424, %v1393, %v974
      %v1427 = vsel %vm1424, %v1394, %v976
      %v1428 = vsel %vm1424, %v1395, %v978
      %v1429 = vsel %vm1424, %v1396, %v980
      %v1430 = vsel %vm1424, %v1397, %v982
      %v1431 = vsel %vm1424, %v1398, %v984
      %v1432 = vsel %vm1424, %v1399, %v986
      %v1433 = vsel %vm1424, %v1400, %v988
      %v1434 = vsel %vm1424, %v1401, %v990
      %v1435 = vsel %vm1424, %v1402, %v992
      %v1436 = vsel %vm1424, %v1403, %v994
      %v1437 = vsel %vm1424, %v1404, %v996
      %v1438 = vsel %vm1424, %v1405, %v998
      %v1439 = vsel %vm1424, %v1406, %v1000
      %v1440 = vsel %vm1424, %v1407, %v1002
      %v1441 = vsel %vm1424, %v1408, %v1004
      %v1442 = vsel %vm1424, %v1409, %v1006
      %v1443 = vsel %vm1424, %v1410, %v1008
      %v1444 = vsel %vm1424, %v1411, %v1010
      %v1445 = vsel %vm1424, %v1412, %v1012
      %v1446 = vsel %vm1424, %v1413, %v1014
      %v1447 = vsel %vm1424, %v1414, %v1016
      %v1448 = vsel %vm1424, %v1415, %v1018
      %v1449 = vsel %vm1424, %v1416, %v1020
      %v1450 = vsel %vm1424, %v1417, %v1022
      %v1451 = vsel %vm1424, %v1418, %v1024
      %v1452 = vsel %vm1424, %v1419, %v1026
      %v1453 = vsel %vm1424, %v1420, %v1028
      %v1454 = vsel %vm1424, %v1421, %v1030
      %v1455 = vsel %vm1424, %v1422, %v1032
      %v1456 = vsel %vm1424, %v1423, %v1034
      %vm1457 = vcmask 228352
      %v1458 = vsel %vm1457, %v1425, %v1068
      %v1459 = vsel %vm1457, %v1426, %v1070
      %v1460 = vsel %vm1457, %v1427, %v1072
      %v1461 = vsel %vm1457, %v1428, %v1074
      %v1462 = vsel %vm1457, %v1429, %v1076
      %v1463 = vsel %vm1457, %v1430, %v1078
      %v1464 = vsel %vm1457, %v1431, %v1080
      %v1465 = vsel %vm1457, %v1432, %v1082
      %v1466 = vsel %vm1457, %v1433, %v1084
      %v1467 = vsel %vm1457, %v1434, %v1086
      %v1468 = vsel %vm1457, %v1435, %v1088
      %v1469 = vsel %vm1457, %v1436, %v1090
      %v1470 = vsel %vm1457, %v1437, %v1092
      %v1471 = vsel %vm1457, %v1438, %v1094
      %v1472 = vsel %vm1457, %v1439, %v1096
      %v1473 = vsel %vm1457, %v1440, %v1098
      %v1474 = vsel %vm1457, %v1441, %v1100
      %v1475 = vsel %vm1457, %v1442, %v1102
      %v1476 = vsel %vm1457, %v1443, %v1104
      %v1477 = vsel %vm1457, %v1444, %v1106
      %v1478 = vsel %vm1457, %v1445, %v1108
      %v1479 = vsel %vm1457, %v1446, %v1110
      %v1480 = vsel %vm1457, %v1447, %v1112
      %v1481 = vsel %vm1457, %v1448, %v1114
      %v1482 = vsel %vm1457, %v1449, %v1116
      %v1483 = vsel %vm1457, %v1450, %v1118
      %v1484 = vsel %vm1457, %v1451, %v1120
      %v1485 = vsel %vm1457, %v1452, %v1122
      %v1486 = vsel %vm1457, %v1453, %v1124
      %v1487 = vsel %vm1457, %v1454, %v1126
      %v1488 = vsel %vm1457, %v1455, %v1128
      %v1489 = vsel %vm1457, %v1456, %v1130
      %vm1490 = vcmask 261120
      %v1491 = vsel %vm1490, %v1458, %v1164
      %v1492 = vsel %vm1490, %v1459, %v1166
      %v1493 = vsel %vm1490, %v1460, %v1168
      %v1494 = vsel %vm1490, %v1461, %v1170
      %v1495 = vsel %vm1490, %v1462, %v1172
      %v1496 = vsel %vm1490, %v1463, %v1174
      %v1497 = vsel %vm1490, %v1464, %v1176
      %v1498 = vsel %vm1490, %v1465, %v1178
      %v1499 = vsel %vm1490, %v1466, %v1180
      %v1500 = vsel %vm1490, %v1467, %v1182
      %v1501 = vsel %vm1490, %v1468, %v1184
      %v1502 = vsel %vm1490, %v1469, %v1186
      %v1503 = vsel %vm1490, %v1470, %v1188
      %v1504 = vsel %vm1490, %v1471, %v1190
      %v1505 = vsel %vm1490, %v1472, %v1192
      %v1506 = vsel %vm1490, %v1473, %v1194
      %v1507 = vsel %vm1490, %v1474, %v1196
      %v1508 = vsel %vm1490, %v1475, %v1198
      %v1509 = vsel %vm1490, %v1476, %v1200
      %v1510 = vsel %vm1490, %v1477, %v1202
      %v1511 = vsel %vm1490, %v1478, %v1204
      %v1512 = vsel %vm1490, %v1479, %v1206
      %v1513 = vsel %vm1490, %v1480, %v1208
      %v1514 = vsel %vm1490, %v1481, %v1210
      %v1515 = vsel %vm1490, %v1482, %v1212
      %v1516 = vsel %vm1490, %v1483, %v1214
      %v1517 = vsel %vm1490, %v1484, %v1216
      %v1518 = vsel %vm1490, %v1485, %v1218
      %v1519 = vsel %vm1490, %v1486, %v1220
      %v1520 = vsel %vm1490, %v1487, %v1222
      %v1521 = vsel %vm1490, %v1488, %v1224
      %v1522 = vsel %vm1490, %v1489, %v1226
      %v1523 = vpack.c.bf16 %v1492, %v1491
      %v1524 = vpack.c.bf16 %v1494, %v1493
      %v1525 = vpack.c.bf16 %v1496, %v1495
      %v1526 = vpack.c.bf16 %v1498, %v1497
      %v1527 = vpack.c.bf16 %v1500, %v1499
      %v1528 = vpack.c.bf16 %v1502, %v1501
      %v1529 = vpack.c.bf16 %v1504, %v1503
      %v1530 = vpack.c.bf16 %v1506, %v1505
      %v1531 = vpack.c.bf16 %v1508, %v1507
      %v1532 = vpack.c.bf16 %v1510, %v1509
      %v1533 = vpack.c.bf16 %v1512, %v1511
      %v1534 = vpack.c.bf16 %v1514, %v1513
      %v1535 = vpack.c.bf16 %v1516, %v1515
      %v1536 = vpack.c.bf16 %v1518, %v1517
      %v1537 = vpack.c.bf16 %v1520, %v1519
      %v1538 = vpack.c.bf16 %v1522, %v1521
      %v1539 = vld [vmem:[%s1] sm:$0xf]
      %v1540 = vld [vmem:[%s1 + $0x4] sm:$0xf]
      %v1541 = vld [vmem:[%s1 + $0x8] sm:$0xf]
      %v1542 = vld [vmem:[%s1 + $0xc] sm:$0xf]
      %v1543 = vld [vmem:[%s1 + $0x10] sm:$0x3]
      %v1544 = vld [vmem:[%s2] sm:$0x1]
      %v1546 = vlaneseq
      %v1547 = vshrl.u32 %v1546, 7
      %v1548 = vsub.s32 0, %v1547
      %v1549 = vrot.slane %v1544, %v1548
      %v1556 = vunpack.c.l.b16 %v1539
      %v1557 = vunpack.c.l.b16 %v1540
      %v1558 = vunpack.c.l.b16 %v1541
      %v1559 = vunpack.c.l.b16 %v1542
      %v1560 = vunpack.c.l.b16 %v1543
      %v1561 = vpack.c.b16 %v1557, %v1556
      %v1562 = vpack.c.b16 %v1559, %v1558
      %v1563 = vpack.c.b16 %v1560, %v1560
      %vm1566 = vcmask 293888
      %v1568 = vsel %vm1566, %v1523, 0
      %v1571 = vsel %vm1566, %v1524, 0
      %v1574 = vsel %vm1566, %v1525, 0
      %v1577 = vsel %vm1566, %v1526, 0
      %v1580 = vsel %vm1566, %v1527, 0
      %v1583 = vsel %vm1566, %v1528, 0
      %v1586 = vsel %vm1566, %v1529, 0
      %v1589 = vsel %vm1566, %v1530, 0
      %v1592 = vsel %vm1566, %v1531, 0
      %v1595 = vsel %vm1566, %v1532, 0
      %v1598 = vsel %vm1566, %v1533, 0
      %v1601 = vsel %vm1566, %v1534, 0
      %v1604 = vsel %vm1566, %v1535, 0
      %v1607 = vsel %vm1566, %v1536, 0
      %v1610 = vsel %vm1566, %v1537, 0
      %v1613 = vsel %vm1566, %v1538, 0
      %vm1615 = vcmask 1041408
      %v1617 = vsel %vm1615, %v1563, 0
      %1619 = vmatprep.subr.bf16.mxu0 0
      %1620 = vmatpush1.bf16.msra.mxu0 %v1561
      %1621 = vmatprep.subr.bf16.mxu0 0
      %1622 = vmatpush1.bf16.msra.mxu0 %v1562
      %1623 = vmatprep.subr.bf16.mxu0 0
      %1624 = vmatpush1.bf16.msra.mxu0 %v1617
      %1625 = vmatprep.subr.bf16.mxu0 0
      %1626 = vmatpush1.bf16.msra.mxu0 0
      %1627 = vmatprep.subr.bf16.mxu0 0
      %1628 = vmatpush1.bf16.msra.mxu0 0
      %1629 = vmatprep.subr.bf16.mxu0 0
      %1630 = vmatpush1.bf16.msra.mxu0 0
      %1631 = vmatprep.subr.bf16.mxu0 0
      %1632 = vmatpush1.bf16.msra.mxu0 0
      %1633 = vmatprep.subr.bf16.mxu0 0
      %1634 = vmatpush1.bf16.msra.mxu0 0
      %1635 = vmatprep.subr.bf16.mxu0 0
      %1636 = vmatpush1.bf16.msra.mxu0 0
      %1637 = vmatprep.subr.bf16.mxu0 0
      %1638 = vmatpush1.bf16.msra.mxu0 0
      %1639 = vmatprep.subr.bf16.mxu0 0
      %1640 = vmatpush1.bf16.msra.mxu0 0
      %1641 = vmatprep.subr.bf16.mxu0 0
      %1642 = vmatpush1.bf16.msra.mxu0 0
      %1643 = vmatprep.subr.bf16.mxu0 0
      %1644 = vmatpush1.bf16.msra.mxu0 0
      %1645 = vmatprep.subr.bf16.mxu0 0
      %1646 = vmatpush1.bf16.msra.mxu0 0
      %1647 = vmatprep.subr.bf16.mxu0 0
      %1648 = vmatpush1.bf16.msra.mxu0 0
      %1649 = vmatprep.subr.bf16.mxu0 0
      %1650 = vmatpush1.bf16.msra.mxu0 0
      %1651 = vmatprep.mubr.bf16.mxu0 0
      %1652 = vmatmul.mubr.bf16.gmra.mrb[0].mxu0 %v1568
      %v1653 = vpop.f32.mrb[0].mxu0
      %v1654 = vadd.f32 %v1549, %v1653
      %v1655 = vpop.f32.mrb[0].mxu0
      %v1656 = vpop.f32.mrb[0].mxu0
      %v1657 = vadd.f32 %v1549, %v1656
      %v1658 = vpop.f32.mrb[0].mxu0
      %1659 = vmatprep.mubr.bf16.mxu0 0
      %1660 = vmatmul.mubr.bf16.gmra.mrb[0].mxu0 %v1571
      %v1661 = vpop.f32.mrb[0].mxu0
      %v1662 = vadd.f32 %v1549, %v1661
      %v1663 = vpop.f32.mrb[0].mxu0
      %v1664 = vpop.f32.mrb[0].mxu0
      %v1665 = vadd.f32 %v1549, %v1664
      %v1666 = vpop.f32.mrb[0].mxu0
      %1667 = vmatprep.mubr.bf16.mxu0 0
      %1668 = vmatmul.mubr.bf16.gmra.mrb[0].mxu0 %v1574
      %v1669 = vpop.f32.mrb[0].mxu0
      %v1670 = vadd.f32 %v1549, %v1669
      %v1671 = vpop.f32.mrb[0].mxu0
      %v1672 = vpop.f32.mrb[0].mxu0
      %v1673 = vadd.f32 %v1549, %v1672
      %v1674 = vpop.f32.mrb[0].mxu0
      %1675 = vmatprep.mubr.bf16.mxu0 0
      %1676 = vmatmul.mubr.bf16.gmra.mrb[0].mxu0 %v1577
      %v1677 = vpop.f32.mrb[0].mxu0
      %v1678 = vadd.f32 %v1549, %v1677
      %v1679 = vpop.f32.mrb[0].mxu0
      %v1680 = vpop.f32.mrb[0].mxu0
      %v1681 = vadd.f32 %v1549, %v1680
      %v1682 = vpop.f32.mrb[0].mxu0
      %1683 = vmatprep.mubr.bf16.mxu0 0
      %1684 = vmatmul.mubr.bf16.gmra.mrb[0].mxu0 %v1580
      %v1685 = vpop.f32.mrb[0].mxu0
      %v1686 = vadd.f32 %v1549, %v1685
      %v1687 = vpop.f32.mrb[0].mxu0
      %v1688 = vpop.f32.mrb[0].mxu0
      %v1689 = vadd.f32 %v1549, %v1688
      %v1690 = vpop.f32.mrb[0].mxu0
      %1691 = vmatprep.mubr.bf16.mxu0 0
      %1692 = vmatmul.mubr.bf16.gmra.mrb[0].mxu0 %v1583
      %v1693 = vpop.f32.mrb[0].mxu0
      %v1694 = vadd.f32 %v1549, %v1693
      %v1695 = vpop.f32.mrb[0].mxu0
      %v1696 = vpop.f32.mrb[0].mxu0
      %v1697 = vadd.f32 %v1549, %v1696
      %v1698 = vpop.f32.mrb[0].mxu0
      %1699 = vmatprep.mubr.bf16.mxu0 0
      %1700 = vmatmul.mubr.bf16.gmra.mrb[0].mxu0 %v1586
      %v1701 = vpop.f32.mrb[0].mxu0
      %v1702 = vadd.f32 %v1549, %v1701
      %v1703 = vpop.f32.mrb[0].mxu0
      %v1704 = vpop.f32.mrb[0].mxu0
      %v1705 = vadd.f32 %v1549, %v1704
      %v1706 = vpop.f32.mrb[0].mxu0
      %1707 = vmatprep.mubr.bf16.mxu0 0
      %1708 = vmatmul.mubr.bf16.gmra.mrb[0].mxu0 %v1589
      %v1709 = vpop.f32.mrb[0].mxu0
      %v1710 = vadd.f32 %v1549, %v1709
      %v1711 = vpop.f32.mrb[0].mxu0
      %v1712 = vpop.f32.mrb[0].mxu0
      %v1713 = vadd.f32 %v1549, %v1712
      %v1714 = vpop.f32.mrb[0].mxu0
      %1715 = vmatprep.mubr.bf16.mxu0 0
      %1716 = vmatmul.mubr.bf16.gmra.mrb[0].mxu0 %v1592
      %v1717 = vpop.f32.mrb[0].mxu0
      %v1718 = vadd.f32 %v1549, %v1717
      %v1719 = vpop.f32.mrb[0].mxu0
      %v1720 = vpop.f32.mrb[0].mxu0
      %v1721 = vadd.f32 %v1549, %v1720
      %v1722 = vpop.f32.mrb[0].mxu0
      %1723 = vmatprep.mubr.bf16.mxu0 0
      %1724 = vmatmul.mubr.bf16.gmra.mrb[0].mxu0 %v1595
      %v1725 = vpop.f32.mrb[0].mxu0
      %v1726 = vadd.f32 %v1549, %v1725
      %v1727 = vpop.f32.mrb[0].mxu0
      %v1728 = vpop.f32.mrb[0].mxu0
      %v1729 = vadd.f32 %v1549, %v1728
      %v1730 = vpop.f32.mrb[0].mxu0
      %1731 = vmatprep.mubr.bf16.mxu0 0
      %1732 = vmatmul.mubr.bf16.gmra.mrb[0].mxu0 %v1598
      %v1733 = vpop.f32.mrb[0].mxu0
      %v1734 = vadd.f32 %v1549, %v1733
      %v1735 = vpop.f32.mrb[0].mxu0
      %v1736 = vpop.f32.mrb[0].mxu0
      %v1737 = vadd.f32 %v1549, %v1736
      %v1738 = vpop.f32.mrb[0].mxu0
      %1739 = vmatprep.mubr.bf16.mxu0 0
      %1740 = vmatmul.mubr.bf16.gmra.mrb[0].mxu0 %v1601
      %v1741 = vpop.f32.mrb[0].mxu0
      %v1742 = vadd.f32 %v1549, %v1741
      %v1743 = vpop.f32.mrb[0].mxu0
      %v1744 = vpop.f32.mrb[0].mxu0
      %v1745 = vadd.f32 %v1549, %v1744
      %v1746 = vpop.f32.mrb[0].mxu0
      %1747 = vmatprep.mubr.bf16.mxu0 0
      %1748 = vmatmul.mubr.bf16.gmra.mrb[0].mxu0 %v1604
      %v1749 = vpop.f32.mrb[0].mxu0
      %v1750 = vadd.f32 %v1549, %v1749
      %v1751 = vpop.f32.mrb[0].mxu0
      %v1752 = vpop.f32.mrb[0].mxu0
      %v1753 = vadd.f32 %v1549, %v1752
      %v1754 = vpop.f32.mrb[0].mxu0
      %1755 = vmatprep.mubr.bf16.mxu0 0
      %1756 = vmatmul.mubr.bf16.gmra.mrb[0].mxu0 %v1607
      %v1757 = vpop.f32.mrb[0].mxu0
      %v1758 = vadd.f32 %v1549, %v1757
      %v1759 = vpop.f32.mrb[0].mxu0
      %v1760 = vpop.f32.mrb[0].mxu0
      %v1761 = vadd.f32 %v1549, %v1760
      %v1762 = vpop.f32.mrb[0].mxu0
      %1763 = vmatprep.mubr.bf16.mxu0 0
      %1764 = vmatmul.mubr.bf16.gmra.mrb[0].mxu0 %v1610
      %v1765 = vpop.f32.mrb[0].mxu0
      %v1766 = vadd.f32 %v1549, %v1765
      %v1767 = vpop.f32.mrb[0].mxu0
      %v1768 = vpop.f32.mrb[0].mxu0
      %v1769 = vadd.f32 %v1549, %v1768
      %v1770 = vpop.f32.mrb[0].mxu0
      %1771 = vmatprep.mubr.bf16.mxu0 0
      %1772 = vmatmul.mubr.bf16.gmra.mrb[0].mxu0 %v1613
      %v1773 = vpop.f32.mrb[0].mxu0
      %v1774 = vadd.f32 %v1549, %v1773
      %v1775 = vpop.f32.mrb[0].mxu0
      %v1776 = vpop.f32.mrb[0].mxu0
      %v1777 = vadd.f32 %v1549, %v1776
      %v1778 = vpop.f32.mrb[0].mxu0
      %1779 = vdwg.mxu0
      %v1780 = vld [vmem:[#allocation2] sm:$0x1]
      %s1781 = vtos %v1780
      %vm1782 = vcmp.gt.f32.partialorder %v1654, 0.0
      %vm1783 = vcmp.gt.f32.partialorder %v1657, 0.0
      %vm1784 = vcmp.gt.f32.partialorder %v1662, 0.0
      %vm1785 = vcmp.gt.f32.partialorder %v1665, 0.0
      %vm1786 = vcmp.gt.f32.partialorder %v1670, 0.0
      %vm1787 = vcmp.gt.f32.partialorder %v1673, 0.0
      %vm1788 = vcmp.gt.f32.partialorder %v1678, 0.0
      %vm1789 = vcmp.gt.f32.partialorder %v1681, 0.0
      %vm1790 = vcmp.gt.f32.partialorder %v1686, 0.0
      %vm1791 = vcmp.gt.f32.partialorder %v1689, 0.0
      %vm1792 = vcmp.gt.f32.partialorder %v1694, 0.0
      %vm1793 = vcmp.gt.f32.partialorder %v1697, 0.0
      %vm1794 = vcmp.gt.f32.partialorder %v1702, 0.0
      %vm1795 = vcmp.gt.f32.partialorder %v1705, 0.0
      %vm1796 = vcmp.gt.f32.partialorder %v1710, 0.0
      %vm1797 = vcmp.gt.f32.partialorder %v1713, 0.0
      %vm1798 = vcmp.gt.f32.partialorder %v1718, 0.0
      %vm1799 = vcmp.gt.f32.partialorder %v1721, 0.0
      %vm1800 = vcmp.gt.f32.partialorder %v1726, 0.0
      %vm1801 = vcmp.gt.f32.partialorder %v1729, 0.0
      %vm1802 = vcmp.gt.f32.partialorder %v1734, 0.0
      %vm1803 = vcmp.gt.f32.partialorder %v1737, 0.0
      %vm1804 = vcmp.gt.f32.partialorder %v1742, 0.0
      %vm1805 = vcmp.gt.f32.partialorder %v1745, 0.0
      %vm1806 = vcmp.gt.f32.partialorder %v1750, 0.0
      %vm1807 = vcmp.gt.f32.partialorder %v1753, 0.0
      %vm1808 = vcmp.gt.f32.partialorder %v1758, 0.0
      %vm1809 = vcmp.gt.f32.partialorder %v1761, 0.0
      %vm1810 = vcmp.gt.f32.partialorder %v1766, 0.0
      %vm1811 = vcmp.gt.f32.partialorder %v1769, 0.0
      %vm1812 = vcmp.gt.f32.partialorder %v1774, 0.0
      %vm1813 = vcmp.gt.f32.partialorder %v1777, 0.0
      %v1814 = vstv %s1781
      %v1815 = vmul.f32 %v1814, %v1654
      %v1816 = vmul.f32 %v1814, %v1657
      %v1817 = vmul.f32 %v1814, %v1662
      %v1818 = vmul.f32 %v1814, %v1665
      %v1819 = vmul.f32 %v1814, %v1670
      %v1820 = vmul.f32 %v1814, %v1673
      %v1821 = vmul.f32 %v1814, %v1678
      %v1822 = vmul.f32 %v1814, %v1681
      %v1823 = vmul.f32 %v1814, %v1686
      %v1824 = vmul.f32 %v1814, %v1689
      %v1825 = vmul.f32 %v1814, %v1694
      %v1826 = vmul.f32 %v1814, %v1697
      %v1827 = vmul.f32 %v1814, %v1702
      %v1828 = vmul.f32 %v1814, %v1705
      %v1829 = vmul.f32 %v1814, %v1710
      %v1830 = vmul.f32 %v1814, %v1713
      %v1831 = vmul.f32 %v1814, %v1718
      %v1832 = vmul.f32 %v1814, %v1721
      %v1833 = vmul.f32 %v1814, %v1726
      %v1834 = vmul.f32 %v1814, %v1729
      %v1835 = vmul.f32 %v1814, %v1734
      %v1836 = vmul.f32 %v1814, %v1737
      %v1837 = vmul.f32 %v1814, %v1742
      %v1838 = vmul.f32 %v1814, %v1745
      %v1839 = vmul.f32 %v1814, %v1750
      %v1840 = vmul.f32 %v1814, %v1753
      %v1841 = vmul.f32 %v1814, %v1758
      %v1842 = vmul.f32 %v1814, %v1761
      %v1843 = vmul.f32 %v1814, %v1766
      %v1844 = vmul.f32 %v1814, %v1769
      %v1845 = vmul.f32 %v1814, %v1774
      %v1846 = vmul.f32 %v1814, %v1777
      %v1847 = vsel %vm1782, %v1654, %v1815
      %v1848 = vsel %vm1783, %v1657, %v1816
      %v1849 = vsel %vm1784, %v1662, %v1817
      %v1850 = vsel %vm1785, %v1665, %v1818
      %v1851 = vsel %vm1786, %v1670, %v1819
      %v1852 = vsel %vm1787, %v1673, %v1820
      %v1853 = vsel %vm1788, %v1678, %v1821
      %v1854 = vsel %vm1789, %v1681, %v1822
      %v1855 = vsel %vm1790, %v1686, %v1823
      %v1856 = vsel %vm1791, %v1689, %v1824
      %v1857 = vsel %vm1792, %v1694, %v1825
      %v1858 = vsel %vm1793, %v1697, %v1826
      %v1859 = vsel %vm1794, %v1702, %v1827
      %v1860 = vsel %vm1795, %v1705, %v1828
      %v1861 = vsel %vm1796, %v1710, %v1829
      %v1862 = vsel %vm1797, %v1713, %v1830
      %v1863 = vsel %vm1798, %v1718, %v1831
      %v1864 = vsel %vm1799, %v1721, %v1832
      %v1865 = vsel %vm1800, %v1726, %v1833
      %v1866 = vsel %vm1801, %v1729, %v1834
      %v1867 = vsel %vm1802, %v1734, %v1835
      %v1868 = vsel %vm1803, %v1737, %v1836
      %v1869 = vsel %vm1804, %v1742, %v1837
      %v1870 = vsel %vm1805, %v1745, %v1838
      %v1871 = vsel %vm1806, %v1750, %v1839
      %v1872 = vsel %vm1807, %v1753, %v1840
      %v1873 = vsel %vm1808, %v1758, %v1841
      %v1874 = vsel %vm1809, %v1761, %v1842
      %v1875 = vsel %vm1810, %v1766, %v1843
      %v1876 = vsel %vm1811, %v1769, %v1844
      %v1877 = vsel %vm1812, %v1774, %v1845
      %v1878 = vsel %vm1813, %v1777, %v1846
      %1879 = vst.msk [vmem:[%s199] sm:$0xff] %vm1358, %v1847
      %1880 = vst.msk [vmem:[%s199 + $0x8] sm:$0xff] %vm1358, %v1848
      %1881 = vst.msk [vmem:[%s199 + $0x10] sm:$0xff] %vm1358, %v1849
      %1882 = vst.msk [vmem:[%s199 + $0x18] sm:$0xff] %vm1358, %v1850
      %1883 = vst.msk [vmem:[%s199 + $0x20] sm:$0xff] %vm1358, %v1851
      %1884 = vst.msk [vmem:[%s199 + $0x28] sm:$0xff] %vm1358, %v1852
      %1885 = vst.msk [vmem:[%s199 + $0x30] sm:$0xff] %vm1358, %v1853
      %1886 = vst.msk [vmem:[%s199 + $0x38] sm:$0xff] %vm1358, %v1854
      %1887 = vst.msk [vmem:[%s199 + $0x40] sm:$0xff] %vm1358, %v1855
      %1888 = vst.msk [vmem:[%s199 + $0x48] sm:$0xff] %vm1358, %v1856
      %1889 = vst.msk [vmem:[%s199 + $0x50] sm:$0xff] %vm1358, %v1857
      %1890 = vst.msk [vmem:[%s199 + $0x58] sm:$0xff] %vm1358, %v1858
      %1891 = vst.msk [vmem:[%s199 + $0x60] sm:$0xff] %vm1358, %v1859
      %1892 = vst.msk [vmem:[%s199 + $0x68] sm:$0xff] %vm1358, %v1860
      %1893 = vst.msk [vmem:[%s199 + $0x70] sm:$0xff] %vm1358, %v1861
      %1894 = vst.msk [vmem:[%s199 + $0x78] sm:$0xff] %vm1358, %v1862
      %1895 = vst.msk [vmem:[%s199 + $0x80] sm:$0xff] %vm1358, %v1863
      %1896 = vst.msk [vmem:[%s199 + $0x88] sm:$0xff] %vm1358, %v1864
      %1897 = vst.msk [vmem:[%s199 + $0x90] sm:$0xff] %vm1358, %v1865
      %1898 = vst.msk [vmem:[%s199 + $0x98] sm:$0xff] %vm1358, %v1866
      %1899 = vst.msk [vmem:[%s199 + $0xa0] sm:$0xff] %vm1358, %v1867
      %1900 = vst.msk [vmem:[%s199 + $0xa8] sm:$0xff] %vm1358, %v1868
      %1901 = vst.msk [vmem:[%s199 + $0xb0] sm:$0xff] %vm1358, %v1869
      %1902 = vst.msk [vmem:[%s199 + $0xb8] sm:$0xff] %vm1358, %v1870
      %1903 = vst.msk [vmem:[%s199 + $0xc0] sm:$0xff] %vm1358, %v1871
      %1904 = vst.msk [vmem:[%s199 + $0xc8] sm:$0xff] %vm1358, %v1872
      %1905 = vst.msk [vmem:[%s199 + $0xd0] sm:$0xff] %vm1358, %v1873
      %1906 = vst.msk [vmem:[%s199 + $0xd8] sm:$0xff] %vm1358, %v1874
      %1907 = vst.msk [vmem:[%s199 + $0xe0] sm:$0xff] %vm1358, %v1875
      %1908 = vst.msk [vmem:[%s199 + $0xe8] sm:$0xff] %vm1358, %v1876
      %1909 = vst.msk [vmem:[%s199 + $0xf0] sm:$0xff] %vm1358, %v1877
      %1910 = vst.msk [vmem:[%s199 + $0xf8] sm:$0xff] %vm1358, %v1878
      %p1911 = scmp.lt.s32.totalorder %s17, 1
      %s1912 = scalar_select %p1911, %s17, 1
      %s1913 = smul.addr %s1912, 32
      %s1914 = smul.addr %s1913, 8
      %s1915 = scalar_lea.vmem %s4, %s1914
      // Predicated region
      $region37: #{upsample_block.1} parent=35 // pred_check
        %p1916 = pneg %p124
      $region38: #{upsample_block.1} parent=35 // pred_check_branch
        %1918 = sbr.rel (%p1916) target = $region40
      $region39: #{upsample_block.1} parent=35 // pred_region
        _
      $region40: #{upsample_block.1} parent=35 // pred_fallthru
        _
    $region36: #{upsample_block.1} parent=5 // pred_fallthru
      _
    %p1919 = scmp.le.s32.totalorder 2, %s12
    // Predicated region
    $region41: #{upsample_block.1} parent=5 // pred_check
      %p1920 = pneg %p1919
    $region42: #{upsample_block.1} parent=5 // pred_check_branch
      %1922 = sbr.rel (%p1920) target = $region44
    $region43: #{upsample_block.1} parent=5 // pred_region
      %s1923 = ssub.s32 %s12, 2
      // Predicated region
      $region45: #{upsample_block.1} parent=43 // pred_check
        %p1924 = pneg %p130
      $region46: #{upsample_block.1} parent=43 // pred_check_branch
        %1926 = sbr.rel (%p1924) target = $region48
      $region47: #{upsample_block.1} parent=43 // pred_region
        %p1927 = scmp.lt.s32.totalorder %s18, 1
        %s1928 = scalar_select %p1927, %s18, 1
        %s1929 = smul.addr %s1928, 32
        %s1930 = smul.addr %s1929, 8
        %s1931 = scalar_lea.vmem %s4, %s1930
      $region48: #{upsample_block.1} parent=43 // pred_fallthru
        _
    $region44: #{upsample_block.1} parent=5 // pred_fallthru
      _
  $region6: #{upsample_block.1} parent=0 // loop_footer
    %s16 = sadd.s32 1, %s12
  $region7: #{upsample_block.1} parent=0 // loop_footer_branch
    %11 = sbr.rel target = $region3
  $region8: #{upsample_block.1} parent=0 // loop_exit
    _

</llo_original>
